<compile_context>
chip_gen: v6e
topology: v6e:2x2x1
jax: 0.10.0
libtpu: 0.0.40
codegen_flags: <defaults>
</compile_context>

<pallas_src>
import functools

import jax
import jax.numpy as jnp
from jax import lax
from jax.experimental import pallas as pl
from jax.experimental.pallas import tpu as pltpu

EPS = 1e-6


def _sublayer_kernel(x_ref, gama_ref, beta_ref, w_ref, b_ref, o_ref):
    """One (tile_rows, D) slab: out = x + (LayerNorm(x) @ W + b)."""
    x = x_ref[...].astype(jnp.float32)   # (T, D), upcast in-kernel (free vs HBM)
    d = x.shape[-1]

    gama = gama_ref[...]                 # (1, D) f32
    beta = beta_ref[...]                 # (1, D) f32
    bias = b_ref[...]                    # (1, D) f32

    # --- pre-LayerNorm (torch semantics: unbiased std, eps added to std) ---
    # Two independent cross-lane reductions (E[x] and E[x^2]) instead of a
    # serial mean -> center -> sum(x^2) chain.
    mean = jnp.mean(x, axis=-1, keepdims=True)
    mean_sq = jnp.mean(x * x, axis=-1, keepdims=True)
    var_unbiased = (mean_sq - mean * mean) * (d / (d - 1.0))
    std = jnp.sqrt(jnp.maximum(var_unbiased, 0.0))
    inv = 1.0 / (std + EPS)                       # exact; EUP/VPU slack is huge
    x_norm = gama * ((x - mean) * inv) + beta

    # --- main_logic: Linear(D, D) on the MXU, full f32 precision ---
    y = jnp.dot(x_norm, w_ref[...],
                preferred_element_type=jnp.float32,
                precision=lax.Precision.HIGHEST)

    # --- dropout (eval mode => identity); bias folded into the residual add ---
    o_ref[...] = (x + bias + y).astype(o_ref.dtype)


def _choose_tile_rows(rows, requested, min_steps=4):
    """Largest sublane-aligned tile with >= min_steps grid steps (2 per v7x TC)."""
    if rows <= 8:
        return rows                      # full-extent block is always legal
    t = max(8, min(requested, rows))
    t -= t % 8
    cap = (rows // min_steps) // 8 * 8   # keep at least min_steps grid steps
    if cap >= 8:
        t = min(t, cap)
    return max(t, 8)


def _vmem_limit_bytes(t, d, in_itemsize, out_itemsize):
    """Scoped-VMEM limit sized to the double-buffered footprint (v5e default 16 MiB)."""
    stream = 2 * t * d * (in_itemsize + out_itemsize)     # x + out, double-buffered
    resident = 2 * (d * d * 4 + 3 * d * 4)                # W + gama/beta/bias
    est = stream + resident + (4 << 20)                    # compiler scratch headroom
    return int(min(56 << 20, max(32 << 20, est)))


@functools.partial(jax.jit, static_argnames=("tile_rows",))
def sublayer_forward(x, gama, beta, w, b, *, tile_rows=2048):
    """x: (B, S, D). Returns x + Linear(LayerNorm(x)) (dropout in eval mode)."""
    B, S, D = x.shape
    rows = B * S
    t = _choose_tile_rows(rows, tile_rows)

    x2d = x.reshape(rows, D)                              # native dtype, no copy
    gama2d = gama.reshape(1, D).astype(jnp.float32)
    beta2d = beta.reshape(1, D).astype(jnp.float32)
    b2d = b.reshape(1, D).astype(jnp.float32)
    w2d = w.astype(jnp.float32)

    out = pl.pallas_call(
        _sublayer_kernel,
        out_shape=jax.ShapeDtypeStruct((rows, D), x.dtype),
        grid_spec=pl.GridSpec(
            grid=(pl.cdiv(rows, t),),                     # ragged tail handled by Pallas
            in_specs=[
                pl.BlockSpec((t, D), lambda i: (i, 0)),   # x tile (streamed)
                pl.BlockSpec((1, D), lambda i: (0, 0)),   # gama (resident)
                pl.BlockSpec((1, D), lambda i: (0, 0)),   # beta (resident)
                pl.BlockSpec((D, D), lambda i: (0, 0)),   # W    (resident)
                pl.BlockSpec((1, D), lambda i: (0, 0)),   # bias (resident)
            ],
            out_specs=pl.BlockSpec((t, D), lambda i: (i, 0)),
        ),
        compiler_params=pltpu.CompilerParams(
            dimension_semantics=("parallel",),
            vmem_limit_bytes=_vmem_limit_bytes(
                t, D, x.dtype.itemsize, x.dtype.itemsize),
        ),
    )(x2d, gama2d, beta2d, w2d, b2d)

    return out.reshape(B, S, D)


def _reference(x, gama, beta, w, b):
    xf = x.astype(jnp.float32)
    mean = jnp.mean(xf, axis=-1, keepdims=True)
    xc = xf - mean
    var_unbiased = jnp.sum(xc * xc, axis=-1, keepdims=True) / (xf.shape[-1] - 1)
    std = jnp.sqrt(var_unbiased)
    x_norm = gama * xc / (std + EPS) + beta
    return xf + (x_norm @ w + b)


if __name__ == "__main__":
    # Small, lane-dense shapes: d_model = 128, 2*256 = 512 rows -> 4 grid steps.
    B, S, D = 2, 256, 128

    key = jax.random.PRNGKey(0)
    kx, kw, kb = jax.random.split(key, 3)

    x = jax.random.normal(kx, (B, S, D), dtype=jnp.float32)

    # LayerNorm params exactly as in __init__: gama=ones, beta=zeros.
    gama = jnp.ones((D,), jnp.float32)
    beta = jnp.zeros((D,), jnp.float32)

    # Deterministic synthetic main_logic = Linear(D, D).
    w = jax.random.normal(kw, (D, D), dtype=jnp.float32) / jnp.sqrt(D)
    b = 0.01 * jax.random.normal(kb, (D,), dtype=jnp.float32)

    out = jax.block_until_ready(sublayer_forward(x, gama, beta, w, b))

    ref = _reference(x, gama, beta, w, b)
    # f32 MXU matmul (HIGHEST) + exact reciprocal => tight tolerance.
    assert jnp.allclose(out, ref, atol=2e-3, rtol=2e-3), "mismatch vs reference"
    assert out.shape == x.shape and out.dtype == x.dtype

    print("KERNEL_OK")
</pallas_src>

<mosaic_0001>
module attributes {stable_mosaic.version = 11 : i64} {
  func.func @_sublayer_kernel(%arg0: i32, %arg1: memref<128x128xf32, #tpu.memory_space<vmem>>, %arg2: memref<1x128xf32, #tpu.memory_space<vmem>>, %arg3: memref<1x128xf32, #tpu.memory_space<vmem>>, %arg4: memref<128x128xf32, #tpu.memory_space<vmem>>, %arg5: memref<1x128xf32, #tpu.memory_space<vmem>>, %arg6: memref<128x128xf32, #tpu.memory_space<vmem>>) attributes {dimension_semantics = [#tpu.dimension_semantics<parallel>], iteration_bounds = array<i64: 4>, scalar_prefetch = 0 : i64, scratch_operands = 0 : i64, tpu.core_type = #tpu.core_type<tc>, window_params = [{transform_indices = @transform_0, window_bounds = array<i64: 128, 128>}, {pipeline_mode = #tpu.pipeline_mode<synchronous>, transform_indices = @transform_1, window_bounds = array<i64: 1, 128>}, {pipeline_mode = #tpu.pipeline_mode<synchronous>, transform_indices = @transform_2, window_bounds = array<i64: 1, 128>}, {pipeline_mode = #tpu.pipeline_mode<synchronous>, transform_indices = @transform_3, window_bounds = array<i64: 128, 128>}, {pipeline_mode = #tpu.pipeline_mode<synchronous>, transform_indices = @transform_4, window_bounds = array<i64: 1, 128>}, {transform_indices = @transform_5, window_bounds = array<i64: 128, 128>}]} {
    %c0 = arith.constant 0 : index
    %c0_0 = arith.constant 0 : index
    %0 = vector.load %arg1[%c0, %c0_0] : memref<128x128xf32, #tpu.memory_space<vmem>>, vector<128x128xf32>
    %c0_1 = arith.constant 0 : index
    %c0_2 = arith.constant 0 : index
    %1 = vector.load %arg2[%c0_1, %c0_2] : memref<1x128xf32, #tpu.memory_space<vmem>>, vector<1x128xf32>
    %c0_3 = arith.constant 0 : index
    %c0_4 = arith.constant 0 : index
    %2 = vector.load %arg3[%c0_3, %c0_4] : memref<1x128xf32, #tpu.memory_space<vmem>>, vector<1x128xf32>
    %c0_5 = arith.constant 0 : index
    %c0_6 = arith.constant 0 : index
    %3 = vector.load %arg5[%c0_5, %c0_6] : memref<1x128xf32, #tpu.memory_space<vmem>>, vector<1x128xf32>
    %cst = arith.constant dense<0.000000e+00> : vector<128xf32>
    %4 = vector.multi_reduction <add>, %0, %cst [1] : vector<128x128xf32> to vector<128xf32>
    %5 = vector.shape_cast %4 : vector<128xf32> to vector<128x1xf32>
    %cst_7 = arith.constant 1.280000e+02 : f32
    %6 = vector.broadcast %cst_7 : f32 to vector<128x1xf32>
    %7 = arith.divf %5, %6 : vector<128x1xf32>
    %8 = arith.mulf %0, %0 : vector<128x128xf32>
    %cst_8 = arith.constant dense<0.000000e+00> : vector<128xf32>
    %9 = vector.multi_reduction <add>, %8, %cst_8 [1] : vector<128x128xf32> to vector<128xf32>
    %10 = vector.shape_cast %9 : vector<128xf32> to vector<128x1xf32>
    %cst_9 = arith.constant 1.280000e+02 : f32
    %11 = vector.broadcast %cst_9 : f32 to vector<128x1xf32>
    %12 = arith.divf %10, %11 : vector<128x1xf32>
    %13 = arith.mulf %7, %7 : vector<128x1xf32>
    %14 = arith.subf %12, %13 : vector<128x1xf32>
    %cst_10 = arith.constant 1.00787401 : f32
    %15 = vector.broadcast %cst_10 : f32 to vector<128x1xf32>
    %16 = arith.mulf %14, %15 : vector<128x1xf32>
    %cst_11 = arith.constant 0.000000e+00 : f32
    %17 = vector.broadcast %cst_11 : f32 to vector<128x1xf32>
    %18 = arith.maximumf %16, %17 : vector<128x1xf32>
    %19 = math.sqrt %18 : vector<128x1xf32>
    %cst_12 = arith.constant 9.99999997E-7 : f32
    %20 = vector.broadcast %cst_12 : f32 to vector<128x1xf32>
    %21 = arith.addf %19, %20 : vector<128x1xf32>
    %cst_13 = arith.constant 1.000000e+00 : f32
    %22 = vector.broadcast %cst_13 : f32 to vector<128x1xf32>
    %23 = arith.divf %22, %21 : vector<128x1xf32>
    %24 = vector.broadcast %7 : vector<128x1xf32> to vector<128x128xf32>
    %25 = arith.subf %0, %24 : vector<128x128xf32>
    %26 = vector.broadcast %23 : vector<128x1xf32> to vector<128x128xf32>
    %27 = arith.mulf %25, %26 : vector<128x128xf32>
    %28 = vector.broadcast %1 : vector<1x128xf32> to vector<128x128xf32>
    %29 = arith.mulf %28, %27 : vector<128x128xf32>
    %30 = vector.broadcast %2 : vector<1x128xf32> to vector<128x128xf32>
    %31 = arith.addf %29, %30 : vector<128x128xf32>
    %c0_14 = arith.constant 0 : index
    %c0_15 = arith.constant 0 : index
    %32 = vector.load %arg4[%c0_14, %c0_15] : memref<128x128xf32, #tpu.memory_space<vmem>>, vector<128x128xf32>
    %cst_16 = arith.constant dense<0.000000e+00> : vector<128x128xf32>
    %33 = tpu.matmul %31, %32, %cst_16 {dimension_numbers = #tpu.dot_dimension_numbers<[1], [0], [0], [1], [0, 0, 1, 1], [], []>, precision = #tpu.contract_precision<fp32>} : vector<128x128xf32>, vector<128x128xf32>, vector<128x128xf32> -> vector<128x128xf32>
    %34 = vector.broadcast %3 : vector<1x128xf32> to vector<128x128xf32>
    %35 = arith.addf %0, %34 : vector<128x128xf32>
    %36 = arith.addf %35, %33 : vector<128x128xf32>
    %c0_17 = arith.constant 0 : index
    %c0_18 = arith.constant 0 : index
    %37 = vector.load %arg6[%c0_17, %c0_18] : memref<128x128xf32, #tpu.memory_space<vmem>>, vector<128x128xf32>
    tpu.vector_store %arg6[%c0_17, %c0_18], %36 {strides = array<i32>} : memref<128x128xf32, #tpu.memory_space<vmem>>, vector<128x128xf32>,
    return
  }
  func.func @transform_0(%arg0: i32) -> (i32, i32) {
    %c0_i32 = arith.constant 0 : i32
    %c0_i32_0 = arith.constant 0 : i32
    return %arg0, %c0_i32 : i32, i32
  }
  func.func @transform_1(%arg0: i32) -> (i32, i32) {
    %c0_i32 = arith.constant 0 : i32
    %c0_i32_0 = arith.constant 0 : i32
    %c0_i32_1 = arith.constant 0 : i32
    return %c0_i32, %c0_i32_0 : i32, i32
  }
  func.func @transform_2(%arg0: i32) -> (i32, i32) {
    %c0_i32 = arith.constant 0 : i32
    %c0_i32_0 = arith.constant 0 : i32
    %c0_i32_1 = arith.constant 0 : i32
    return %c0_i32, %c0_i32_0 : i32, i32
  }
  func.func @transform_3(%arg0: i32) -> (i32, i32) {
    %c0_i32 = arith.constant 0 : i32
    %c0_i32_0 = arith.constant 0 : i32
    %c0_i32_1 = arith.constant 0 : i32
    return %c0_i32, %c0_i32_0 : i32, i32
  }
  func.func @transform_4(%arg0: i32) -> (i32, i32) {
    %c0_i32 = arith.constant 0 : i32
    %c0_i32_0 = arith.constant 0 : i32
    %c0_i32_1 = arith.constant 0 : i32
    return %c0_i32, %c0_i32_0 : i32, i32
  }
  func.func @transform_5(%arg0: i32) -> (i32, i32) {
    %c0_i32 = arith.constant 0 : i32
    %c0_i32_0 = arith.constant 0 : i32
    return %arg0, %c0_i32 : i32, i32
  }
}

</mosaic_0001>

<llo_original>
// kernel: sublayer_forward.1
$region0: #{sublayer_forward.1}
  #allocation0 [shape = 'u32[]', space=smem, size = 0x4, offset = 0x4, fixed_abs, tag = 'smem constant byte address 0x4 - core index']
  #allocation1 [shape = 'u32[144,128]{1,0:T(1,128)}', space=vmem, size = 0x12000, scoped, tag = 'internal scratch']
  %s0 = inlined_call_operand.hbm [shape: f32[512,128], index: 0, kind: input, shape index: {}]
  %s1 = inlined_call_operand.vmem [shape: f32[1,128], index: 1, kind: input, shape index: {}]
  %s2 = inlined_call_operand.vmem [shape: f32[1,128], index: 2, kind: input, shape index: {}]
  %s3 = inlined_call_operand.hbm [shape: f32[128,128], index: 3, kind: input, shape index: {}]
  %s4 = inlined_call_operand.vmem [shape: f32[1,128], index: 4, kind: input, shape index: {}]
  %s5 = inlined_call_operand.hbm [shape: f32[512,128], index: 5, kind: output, shape index: {}]
  %s6 = sld [smem:[#allocation0]]
  $region61: #{sublayer_forward.1} parent=0
    _
  %s8 = ssub.s32 1, %s6
  %s9 = scalar_select 0, %s8, %s6
  $region1: #{sublayer_forward.1} parent=0
    #allocation2 [shape = 'u8[131072]{0}', space=vmem, size = 0x20000, scoped, tag = 'input window, operand 0']
    #allocation3 [shape = 's32[2]{0}', space=sflag, size = 0x8, scoped, tag = 'scoped memory for sublayer_forward.1']
    #allocation4 [shape = 's32[2]{0}', space=sflag, size = 0x8, scoped, tag = 'scoped memory for sublayer_forward.1']
    #allocation5 [shape = 'u8[65536]{0}', space=vmem, size = 0x10000, scoped, tag = 'input window, operand 3, single buffered']
    #allocation6 [shape = 's32[1]{0}', space=sflag, size = 0x4, scoped, tag = 'scoped memory for sublayer_forward.1']
    #allocation7 [shape = 'u8[131072]{0}', space=vmem, size = 0x20000, scoped, tag = 'output window, operand 0']
    %10 = vsyncpa [#allocation3], 0
    %s11 = scalar_lea.sflag [#allocation3], 1
    %12 = vsyncpa %s11, 0
    %13 = vsyncpa [#allocation6], 0
    %14 = vsyncpa [#allocation4], 0
    %s15 = scalar_lea.sflag [#allocation4], 1
    %16 = vsyncpa %s15, 0
    loop: start=0, step=1, limit=6
    $region2: #{sublayer_forward.1} parent=1 // loop_pre_header
      _
    $region3: #{sublayer_forward.1} parent=1 // loop_header
      %s18 = sphi 0, %s22
      %p19 = scmp.ge.s32.totalorder %s18, 6
      %s28 = sphi 0, %s30
      %s31 = sphi 0, %s28
      %s32 = sphi 0, %s31
      %s48 = sphi 0, %s32
      %s52 = sphi 0, %s52
      %s54 = sphi 0, %s52
      %s55 = sphi 0, %s54
      %s69 = sphi 0, %s55
      %s73 = sphi 0, %s73
      %s75 = sphi 0, %s73
      %s76 = sphi 0, %s75
      %s90 = sphi 0, %s76
      %s94 = sphi 0, %s94
      %s96 = sphi 0, %s94
      %s97 = sphi 0, %s96
      %s111 = sphi 0, %s97
      %s115 = sphi 0, %s115
      %s117 = sphi 0, %s115
      %s118 = sphi 0, %s117
      %s132 = sphi 0, %s118
      %s138 = sphi 0, %s140
      %s141 = sphi 0, %s138
      %s142 = sphi 0, %s141
      %s158 = sphi 0, %s142
    $region4: #{sublayer_forward.1} parent=1 // loop_header_branch
      %21 = sbr.rel (%p19) target = $region8
    $region5: #{sublayer_forward.1} parent=1 // loop_body
      %s23 = ssub.s32 %s18, 1
      %s24 = ssub.s32 %s18, 2
      %s25 = sadd.s32 %s18, 1
      %s26 = ssub.s32 %s18, %s25
      %p27 = scmp.eq.s32.totalorder %s26, 0
      %s29 = sadd.s32 %s28, 1
      %s30 = scalar_select %p27, %s28, %s29
      %p33 = pneg %p27
      %p34 = scmp.eq.s32.totalorder %s18, 3
      %p35 = por %p33, %p34
      %p36 = scmp.ne.s32.totalorder %s28, %s31
      %p37 = scmp.eq.s32.totalorder %s18, 0
      %p38 = por %p36, %p37
      %p39 = scmp.ne.s32.totalorder %s28, %s31
      %p40 = scmp.eq.s32.totalorder %s23, 3
      %p41 = por %p39, %p40
      %p42 = scmp.ne.s32.totalorder %s31, %s32
      %p43 = scmp.eq.s32.totalorder %s23, 0
      %p44 = por %p42, %p43
      %p45 = scmp.ne.s32.totalorder %s31, %s32
      %p46 = scmp.eq.s32.totalorder %s24, 3
      %p47 = por %p45, %p46
      %p49 = scmp.ne.s32.totalorder %s32, %s48
      %p50 = scmp.eq.s32.totalorder %s24, 0
      %p51 = por %p49, %p50
      %s53 = sadd.s32 %s52, 1
      %p56 = scmp.eq.s32.totalorder %s18, 3
      %p57 = scmp.ne.s32.totalorder %s52, %s54
      %p58 = scmp.eq.s32.totalorder %s18, 0
      %p59 = por %p57, %p58
      %p60 = scmp.ne.s32.totalorder %s52, %s54
      %p61 = scmp.eq.s32.totalorder %s23, 3
      %p62 = por %p60, %p61
      %p63 = scmp.ne.s32.totalorder %s54, %s55
      %p64 = scmp.eq.s32.totalorder %s23, 0
      %p65 = por %p63, %p64
      %p66 = scmp.ne.s32.totalorder %s54, %s55
      %p67 = scmp.eq.s32.totalorder %s24, 3
      %p68 = por %p66, %p67
      %p70 = scmp.ne.s32.totalorder %s55, %s69
      %p71 = scmp.eq.s32.totalorder %s24, 0
      %p72 = por %p70, %p71
      %s74 = sadd.s32 %s73, 1
      %p77 = scmp.eq.s32.totalorder %s18, 3
      %p78 = scmp.ne.s32.totalorder %s73, %s75
      %p79 = scmp.eq.s32.totalorder %s18, 0
      %p80 = por %p78, %p79
      %p81 = scmp.ne.s32.totalorder %s73, %s75
      %p82 = scmp.eq.s32.totalorder %s23, 3
      %p83 = por %p81, %p82
      %p84 = scmp.ne.s32.totalorder %s75, %s76
      %p85 = scmp.eq.s32.totalorder %s23, 0
      %p86 = por %p84, %p85
      %p87 = scmp.ne.s32.totalorder %s75, %s76
      %p88 = scmp.eq.s32.totalorder %s24, 3
      %p89 = por %p87, %p88
      %p91 = scmp.ne.s32.totalorder %s76, %s90
      %p92 = scmp.eq.s32.totalorder %s24, 0
      %p93 = por %p91, %p92
      %s95 = sadd.s32 %s94, 1
      %p98 = scmp.eq.s32.totalorder %s18, 3
      %p99 = scmp.ne.s32.totalorder %s94, %s96
      %p100 = scmp.eq.s32.totalorder %s18, 0
      %p101 = por %p99, %p100
      %p102 = scmp.ne.s32.totalorder %s94, %s96
      %p103 = scmp.eq.s32.totalorder %s23, 3
      %p104 = por %p102, %p103
      %p105 = scmp.ne.s32.totalorder %s96, %s97
      %p106 = scmp.eq.s32.totalorder %s23, 0
      %p107 = por %p105, %p106
      %p108 = scmp.ne.s32.totalorder %s96, %s97
      %p109 = scmp.eq.s32.totalorder %s24, 3
      %p110 = por %p108, %p109
      %p112 = scmp.ne.s32.totalorder %s97, %s111
      %p113 = scmp.eq.s32.totalorder %s24, 0
      %p114 = por %p112, %p113
      %s116 = sadd.s32 %s115, 1
      %p119 = scmp.eq.s32.totalorder %s18, 3
      %p120 = scmp.ne.s32.totalorder %s115, %s117
      %p121 = scmp.eq.s32.totalorder %s18, 0
      %p122 = por %p120, %p121
      %p123 = scmp.ne.s32.totalorder %s115, %s117
      %p124 = scmp.eq.s32.totalorder %s23, 3
      %p125 = por %p123, %p124
      %p126 = scmp.ne.s32.totalorder %s117, %s118
      %p127 = scmp.eq.s32.totalorder %s23, 0
      %p128 = por %p126, %p127
      %p129 = scmp.ne.s32.totalorder %s117, %s118
      %p130 = scmp.eq.s32.totalorder %s24, 3
      %p131 = por %p129, %p130
      %p133 = scmp.ne.s32.totalorder %s118, %s132
      %p134 = scmp.eq.s32.totalorder %s24, 0
      %p135 = por %p133, %p134
      %s136 = ssub.s32 %s18, %s25
      %p137 = scmp.eq.s32.totalorder %s136, 0
      %s139 = sadd.s32 %s138, 1
      %s140 = scalar_select %p137, %s138, %s139
      %p143 = pneg %p137
      %p144 = scmp.eq.s32.totalorder %s18, 3
      %p145 = por %p143, %p144
      %p146 = scmp.ne.s32.totalorder %s138, %s141
      %p147 = scmp.eq.s32.totalorder %s18, 0
      %p148 = por %p146, %p147
      %p149 = scmp.ne.s32.totalorder %s138, %s141
      %p150 = scmp.eq.s32.totalorder %s23, 3
      %p151 = por %p149, %p150
      %p152 = scmp.ne.s32.totalorder %s141, %s142
      %p153 = scmp.eq.s32.totalorder %s23, 0
      %p154 = por %p152, %p153
      %p155 = scmp.ne.s32.totalorder %s141, %s142
      %p156 = scmp.eq.s32.totalorder %s24, 3
      %p157 = por %p155, %p156
      %p159 = scmp.ne.s32.totalorder %s142, %s158
      %p160 = scmp.eq.s32.totalorder %s24, 0
      %p161 = por %p159, %p160
      %p162 = scmp.le.s32.totalorder 1, %s18
      %p163 = scmp.lt.s32.totalorder %s18, 5
      %p164 = pnand %p162, %p163
      %p165 = pneg %p164
      // Predicated region
      $region9: #{sublayer_forward.1} parent=5 // pred_check
        _
      $region10: #{sublayer_forward.1} parent=5 // pred_check_branch
        %167 = sbr.rel (%p164) target = $region12
      $region11: #{sublayer_forward.1} parent=5 // pred_region
        %s168 = ssub.s32 %s18, 1
        // Predicated region
        $region13: #{sublayer_forward.1} parent=11 // pred_check
          %p169 = pneg %p65
        $region14: #{sublayer_forward.1} parent=11 // pred_check_branch
          %171 = sbr.rel (%p169) target = $region16
        $region15: #{sublayer_forward.1} parent=11 // pred_region
          _
        $region16: #{sublayer_forward.1} parent=11 // pred_fallthru
          _
        // Predicated region
        $region17: #{sublayer_forward.1} parent=11 // pred_check
          %p172 = pneg %p86
        $region18: #{sublayer_forward.1} parent=11 // pred_check_branch
          %174 = sbr.rel (%p172) target = $region20
        $region19: #{sublayer_forward.1} parent=11 // pred_region
          _
        $region20: #{sublayer_forward.1} parent=11 // pred_fallthru
          _
        // Predicated region
        $region21: #{sublayer_forward.1} parent=11 // pred_check
          %p175 = pneg %p107
        $region22: #{sublayer_forward.1} parent=11 // pred_check_branch
          %177 = sbr.rel (%p175) target = $region24
        $region23: #{sublayer_forward.1} parent=11 // pred_region
          %s179 = ssub.s32 2048, 2048
          %180 = vsyncadd [#allocation6], %s179
          %s181 = sshll.u32 [#allocation5], 4
          %s182 = int_to_ptr.vmem [resolvable:$true] %s181
          %187 = dma.hbm_to_vmem [thread:$0]  %s3, 2048, %s182, [#allocation6], 128, 128, 8
        $region24: #{sublayer_forward.1} parent=11 // pred_fallthru
          _
        // Predicated region
        $region25: #{sublayer_forward.1} parent=11 // pred_check
          %p188 = pneg %p128
        $region26: #{sublayer_forward.1} parent=11 // pred_check_branch
          %190 = sbr.rel (%p188) target = $region28
        $region27: #{sublayer_forward.1} parent=11 // pred_region
          _
        $region28: #{sublayer_forward.1} parent=11 // pred_fallthru
          _
      $region12: #{sublayer_forward.1} parent=5 // pred_fallthru
        _
      %p191 = scmp.lt.s32.totalorder %s18, 4
      // Predicated region
      $region29: #{sublayer_forward.1} parent=5 // pred_check
        %p192 = pneg %p191
      $region30: #{sublayer_forward.1} parent=5 // pred_check_branch
        %194 = sbr.rel (%p192) target = $region32
      $region31: #{sublayer_forward.1} parent=5 // pred_region
        // Predicated region
        $region33: #{sublayer_forward.1} parent=31 // pred_check
          %p195 = pneg %p38
        $region34: #{sublayer_forward.1} parent=31 // pred_check_branch
          %197 = sbr.rel (%p195) target = $region36
        $region35: #{sublayer_forward.1} parent=31 // pred_region
          %s198 = sand.u32 %s28, 1
          %s199 = scalar_lea.sflag [#allocation3], %s198
          %s200 = sand.u32 %s28, 1
          %s201 = smul.addr %s200, 128
          %s202 = scalar_lea.vmem [#allocation2], %s201
          %s203 = smul.u32 16, %s18
          %s205 = ssub.s32 2048, 2048
          %206 = vsyncadd %s199, %s205
          %s207 = smul.addr %s203, 128
          %s208 = scalar_lea.hbm %s0, %s207
          %s209 = sshll.u32 %s202, 4
          %s210 = int_to_ptr.vmem [resolvable:$true] %s209
          %215 = dma.hbm_to_vmem [thread:$0]  %s208, 2048, %s210, %s199, 128, 128, 8
        $region36: #{sublayer_forward.1} parent=31 // pred_fallthru
          _
      $region32: #{sublayer_forward.1} parent=5 // pred_fallthru
        _
      %p216 = scmp.le.s32.totalorder 1, %s18
      %p217 = scmp.lt.s32.totalorder %s18, 5
      %p218 = pnand %p216, %p217
      %p219 = pneg %p218
      // Predicated region
      $region37: #{sublayer_forward.1} parent=5 // pred_check
        _
      $region38: #{sublayer_forward.1} parent=5 // pred_check_branch
        %221 = sbr.rel (%p218) target = $region40
      $region39: #{sublayer_forward.1} parent=5 // pred_region
        %s222 = ssub.s32 %s18, 1
        %s223 = sand.u32 %s31, 1
        %s224 = scalar_lea.sflag [#allocation3], %s223
        %s225 = sand.u32 %s31, 1
        %s226 = smul.addr %s225, 128
        %s227 = scalar_lea.vmem [#allocation2], %s226
        // Predicated region
        $region41: #{sublayer_forward.1} parent=39 // pred_check
          %p228 = pneg %p44
        $region42: #{sublayer_forward.1} parent=39 // pred_check_branch
          %230 = sbr.rel (%p228) target = $region44
        $region43: #{sublayer_forward.1} parent=39 // pred_region
          %231 = dma.done %s224, 2048
        $region44: #{sublayer_forward.1} parent=39 // pred_fallthru
          _
        // Predicated region
        $region45: #{sublayer_forward.1} parent=39 // pred_check
          %p232 = pneg %p107
        $region46: #{sublayer_forward.1} parent=39 // pred_check_branch
          %234 = sbr.rel (%p232) target = $region48
        $region47: #{sublayer_forward.1} parent=39 // pred_region
          %235 = dma.done [#allocation6], 2048
        $region48: #{sublayer_forward.1} parent=39 // pred_fallthru
          _
        %s236 = sand.u32 %s31, 1
        %s237 = scalar_lea.sflag [#allocation3], %s236
        %s238 = sand.u32 %s31, 1
        %s239 = smul.addr %s238, 128
        %s240 = scalar_lea.vmem [#allocation2], %s239
        %p241 = pneg %p44
        %p242 = pneg %p41
        %p243 = pneg %p65
        %p244 = pneg %p62
        %p245 = pneg %p86
        %p246 = pneg %p83
        %p247 = pneg %p107
        %p248 = pneg %p104
        %p249 = pneg %p128
        %p250 = pneg %p125
        %p251 = pneg %p154
        %p252 = pneg %p151
        %s253 = sand.u32 %s141, 1
        %s254 = scalar_lea.sflag [#allocation4], %s253
        %s255 = sand.u32 %s141, 1
        %s256 = smul.addr %s255, 128
        %s257 = scalar_lea.vmem [#allocation7], %s256
        %s258 = smul.u32 16, %s23
        %s259 = smul.u32 16, %s23
        %v260 = vld [vmem:[%s227] sm:$0xff]
        %v261 = vld [vmem:[%s227 + $0x8] sm:$0xff]
        %v262 = vld [vmem:[%s227 + $0x10] sm:$0xff]
        %v263 = vld [vmem:[%s227 + $0x18] sm:$0xff]
        %v264 = vld [vmem:[%s227 + $0x20] sm:$0xff]
        %v265 = vld [vmem:[%s227 + $0x28] sm:$0xff]
        %v266 = vld [vmem:[%s227 + $0x30] sm:$0xff]
        %v267 = vld [vmem:[%s227 + $0x38] sm:$0xff]
        %v268 = vld [vmem:[%s227 + $0x40] sm:$0xff]
        %v269 = vld [vmem:[%s227 + $0x48] sm:$0xff]
        %v270 = vld [vmem:[%s227 + $0x50] sm:$0xff]
        %v271 = vld [vmem:[%s227 + $0x58] sm:$0xff]
        %v272 = vld [vmem:[%s227 + $0x60] sm:$0xff]
        %v273 = vld [vmem:[%s227 + $0x68] sm:$0xff]
        %v274 = vld [vmem:[%s227 + $0x70] sm:$0xff]
        %v275 = vld [vmem:[%s227 + $0x78] sm:$0xff]
        %v276 = vld [vmem:[%s1] sm:$0x1]
        %v277 = vld [vmem:[%s2] sm:$0x1]
        %v278 = vld [vmem:[%s4] sm:$0x1]
        %279 = vadd.xlane.f32.xlu0 %v260
        %v280 = vpop.xlane.xlu0 %279
        %281 = vadd.xlane.f32.xlu0 %v261
        %v282 = vpop.xlane.xlu0 %281
        %283 = vadd.xlane.f32.xlu0 %v262
        %v284 = vpop.xlane.xlu0 %283
        %285 = vadd.xlane.f32.xlu0 %v263
        %v286 = vpop.xlane.xlu0 %285
        %287 = vadd.xlane.f32.xlu0 %v264
        %v288 = vpop.xlane.xlu0 %287
        %289 = vadd.xlane.f32.xlu0 %v265
        %v290 = vpop.xlane.xlu0 %289
        %291 = vadd.xlane.f32.xlu0 %v266
        %v292 = vpop.xlane.xlu0 %291
        %293 = vadd.xlane.f32.xlu0 %v267
        %v294 = vpop.xlane.xlu0 %293
        %295 = vadd.xlane.f32.xlu0 %v268
        %v296 = vpop.xlane.xlu0 %295
        %297 = vadd.xlane.f32.xlu0 %v269
        %v298 = vpop.xlane.xlu0 %297
        %299 = vadd.xlane.f32.xlu0 %v270
        %v300 = vpop.xlane.xlu0 %299
        %301 = vadd.xlane.f32.xlu0 %v271
        %v302 = vpop.xlane.xlu0 %301
        %303 = vadd.xlane.f32.xlu0 %v272
        %v304 = vpop.xlane.xlu0 %303
        %305 = vadd.xlane.f32.xlu0 %v273
        %v306 = vpop.xlane.xlu0 %305
        %307 = vadd.xlane.f32.xlu0 %v274
        %v308 = vpop.xlane.xlu0 %307
        %309 = vadd.xlane.f32.xlu0 %v275
        %v310 = vpop.xlane.xlu0 %309
        %v311 = vrcp.pop 128.0
        %v312 = vmul.f32 %v280, %v311
        %v313 = vmul.f32 %v282, %v311
        %v314 = vmul.f32 %v284, %v311
        %v315 = vmul.f32 %v286, %v311
        %v316 = vmul.f32 %v288, %v311
        %v317 = vmul.f32 %v290, %v311
        %v318 = vmul.f32 %v292, %v311
        %v319 = vmul.f32 %v294, %v311
        %v320 = vmul.f32 %v296, %v311
        %v321 = vmul.f32 %v298, %v311
        %v322 = vmul.f32 %v300, %v311
        %v323 = vmul.f32 %v302, %v311
        %v324 = vmul.f32 %v304, %v311
        %v325 = vmul.f32 %v306, %v311
        %v326 = vmul.f32 %v308, %v311
        %v327 = vmul.f32 %v310, %v311
        %v328 = vmul.f32 %v260, %v260
        %v329 = vmul.f32 %v261, %v261
        %v330 = vmul.f32 %v262, %v262
        %v331 = vmul.f32 %v263, %v263
        %v332 = vmul.f32 %v264, %v264
        %v333 = vmul.f32 %v265, %v265
        %v334 = vmul.f32 %v266, %v266
        %v335 = vmul.f32 %v267, %v267
        %v336 = vmul.f32 %v268, %v268
        %v337 = vmul.f32 %v269, %v269
        %v338 = vmul.f32 %v270, %v270
        %v339 = vmul.f32 %v271, %v271
        %v340 = vmul.f32 %v272, %v272
        %v341 = vmul.f32 %v273, %v273
        %v342 = vmul.f32 %v274, %v274
        %v343 = vmul.f32 %v275, %v275
        %344 = vadd.xlane.f32.xlu0 %v328
        %v345 = vpop.xlane.xlu0 %344
        %346 = vadd.xlane.f32.xlu0 %v329
        %v347 = vpop.xlane.xlu0 %346
        %348 = vadd.xlane.f32.xlu0 %v330
        %v349 = vpop.xlane.xlu0 %348
        %350 = vadd.xlane.f32.xlu0 %v331
        %v351 = vpop.xlane.xlu0 %350
        %352 = vadd.xlane.f32.xlu0 %v332
        %v353 = vpop.xlane.xlu0 %352
        %354 = vadd.xlane.f32.xlu0 %v333
        %v355 = vpop.xlane.xlu0 %354
        %356 = vadd.xlane.f32.xlu0 %v334
        %v357 = vpop.xlane.xlu0 %356
        %358 = vadd.xlane.f32.xlu0 %v335
        %v359 = vpop.xlane.xlu0 %358
        %360 = vadd.xlane.f32.xlu0 %v336
        %v361 = vpop.xlane.xlu0 %360
        %362 = vadd.xlane.f32.xlu0 %v337
        %v363 = vpop.xlane.xlu0 %362
        %364 = vadd.xlane.f32.xlu0 %v338
        %v365 = vpop.xlane.xlu0 %364
        %366 = vadd.xlane.f32.xlu0 %v339
        %v367 = vpop.xlane.xlu0 %366
        %368 = vadd.xlane.f32.xlu0 %v340
        %v369 = vpop.xlane.xlu0 %368
        %370 = vadd.xlane.f32.xlu0 %v341
        %v371 = vpop.xlane.xlu0 %370
        %372 = vadd.xlane.f32.xlu0 %v342
        %v373 = vpop.xlane.xlu0 %372
        %374 = vadd.xlane.f32.xlu0 %v343
        %v375 = vpop.xlane.xlu0 %374
        %v376 = vmul.f32 %v345, %v311
        %v377 = vmul.f32 %v347, %v311
        %v378 = vmul.f32 %v349, %v311
        %v379 = vmul.f32 %v351, %v311
        %v380 = vmul.f32 %v353, %v311
        %v381 = vmul.f32 %v355, %v311
        %v382 = vmul.f32 %v357, %v311
        %v383 = vmul.f32 %v359, %v311
        %v384 = vmul.f32 %v361, %v311
        %v385 = vmul.f32 %v363, %v311
        %v386 = vmul.f32 %v365, %v311
        %v387 = vmul.f32 %v367, %v311
        %v388 = vmul.f32 %v369, %v311
        %v389 = vmul.f32 %v371, %v311
        %v390 = vmul.f32 %v373, %v311
        %v391 = vmul.f32 %v375, %v311
        %v392 = vmul.f32 %v312, %v312
        %v393 = vmul.f32 %v313, %v313
        %v394 = vmul.f32 %v314, %v314
        %v395 = vmul.f32 %v315, %v315
        %v396 = vmul.f32 %v316, %v316
        %v397 = vmul.f32 %v317, %v317
        %v398 = vmul.f32 %v318, %v318
        %v399 = vmul.f32 %v319, %v319
        %v400 = vmul.f32 %v320, %v320
        %v401 = vmul.f32 %v321, %v321
        %v402 = vmul.f32 %v322, %v322
        %v403 = vmul.f32 %v323, %v323
        %v404 = vmul.f32 %v324, %v324
        %v405 = vmul.f32 %v325, %v325
        %v406 = vmul.f32 %v326, %v326
        %v407 = vmul.f32 %v327, %v327
        %v408 = vsub.f32 %v376, %v392
        %v409 = vsub.f32 %v377, %v393
        %v410 = vsub.f32 %v378, %v394
        %v411 = vsub.f32 %v379, %v395
        %v412 = vsub.f32 %v380, %v396
        %v413 = vsub.f32 %v381, %v397
        %v414 = vsub.f32 %v382, %v398
        %v415 = vsub.f32 %v383, %v399
        %v416 = vsub.f32 %v384, %v400
        %v417 = vsub.f32 %v385, %v401
        %v418 = vsub.f32 %v386, %v402
        %v419 = vsub.f32 %v387, %v403
        %v420 = vsub.f32 %v388, %v404
        %v421 = vsub.f32 %v389, %v405
        %v422 = vsub.f32 %v390, %v406
        %v423 = vsub.f32 %v391, %v407
        %v424 = vmul.f32 %v408, 1.007874
        %v425 = vmul.f32 %v409, 1.007874
        %v426 = vmul.f32 %v410, 1.007874
        %v427 = vmul.f32 %v411, 1.007874
        %v428 = vmul.f32 %v412, 1.007874
        %v429 = vmul.f32 %v413, 1.007874
        %v430 = vmul.f32 %v414, 1.007874
        %v431 = vmul.f32 %v415, 1.007874
        %v432 = vmul.f32 %v416, 1.007874
        %v433 = vmul.f32 %v417, 1.007874
        %v434 = vmul.f32 %v418, 1.007874
        %v435 = vmul.f32 %v419, 1.007874
        %v436 = vmul.f32 %v420, 1.007874
        %v437 = vmul.f32 %v421, 1.007874
        %v438 = vmul.f32 %v422, 1.007874
        %v439 = vmul.f32 %v423, 1.007874
        %v440 = vmax.f32 %v424, 0.0
        %v441 = vmax.f32 %v425, 0.0
        %v442 = vmax.f32 %v426, 0.0
        %v443 = vmax.f32 %v427, 0.0
        %v444 = vmax.f32 %v428, 0.0
        %v445 = vmax.f32 %v429, 0.0
        %v446 = vmax.f32 %v430, 0.0
        %v447 = vmax.f32 %v431, 0.0
        %v448 = vmax.f32 %v432, 0.0
        %v449 = vmax.f32 %v433, 0.0
        %v450 = vmax.f32 %v434, 0.0
        %v451 = vmax.f32 %v435, 0.0
        %v452 = vmax.f32 %v436, 0.0
        %v453 = vmax.f32 %v437, 0.0
        %v454 = vmax.f32 %v438, 0.0
        %v455 = vmax.f32 %v439, 0.0
        %v456 = vrsqrt.pop %v440
        %v457 = vmul.f32 %v440, %v456
        %vm458 = vcmp.eq.f32.partialorder %v440, inf
        %v459 = vsel %vm458, %v440, %v457
        %vm460 = vcmp.eq.f32.partialorder %v440, 0.0
        %v461 = vand.u32 %v440, 2147483648
        %v462 = vsel %vm460, %v461, %v459
        %v463 = vrsqrt.pop %v441
        %v464 = vmul.f32 %v441, %v463
        %vm465 = vcmp.eq.f32.partialorder %v441, inf
        %v466 = vsel %vm465, %v441, %v464
        %vm467 = vcmp.eq.f32.partialorder %v441, 0.0
        %v468 = vand.u32 %v441, 2147483648
        %v469 = vsel %vm467, %v468, %v466
        %v470 = vrsqrt.pop %v442
        %v471 = vmul.f32 %v442, %v470
        %vm472 = vcmp.eq.f32.partialorder %v442, inf
        %v473 = vsel %vm472, %v442, %v471
        %vm474 = vcmp.eq.f32.partialorder %v442, 0.0
        %v475 = vand.u32 %v442, 2147483648
        %v476 = vsel %vm474, %v475, %v473
        %v477 = vrsqrt.pop %v443
        %v478 = vmul.f32 %v443, %v477
        %vm479 = vcmp.eq.f32.partialorder %v443, inf
        %v480 = vsel %vm479, %v443, %v478
        %vm481 = vcmp.eq.f32.partialorder %v443, 0.0
        %v482 = vand.u32 %v443, 2147483648
        %v483 = vsel %vm481, %v482, %v480
        %v484 = vrsqrt.pop %v444
        %v485 = vmul.f32 %v444, %v484
        %vm486 = vcmp.eq.f32.partialorder %v444, inf
        %v487 = vsel %vm486, %v444, %v485
        %vm488 = vcmp.eq.f32.partialorder %v444, 0.0
        %v489 = vand.u32 %v444, 2147483648
        %v490 = vsel %vm488, %v489, %v487
        %v491 = vrsqrt.pop %v445
        %v492 = vmul.f32 %v445, %v491
        %vm493 = vcmp.eq.f32.partialorder %v445, inf
        %v494 = vsel %vm493, %v445, %v492
        %vm495 = vcmp.eq.f32.partialorder %v445, 0.0
        %v496 = vand.u32 %v445, 2147483648
        %v497 = vsel %vm495, %v496, %v494
        %v498 = vrsqrt.pop %v446
        %v499 = vmul.f32 %v446, %v498
        %vm500 = vcmp.eq.f32.partialorder %v446, inf
        %v501 = vsel %vm500, %v446, %v499
        %vm502 = vcmp.eq.f32.partialorder %v446, 0.0
        %v503 = vand.u32 %v446, 2147483648
        %v504 = vsel %vm502, %v503, %v501
        %v505 = vrsqrt.pop %v447
        %v506 = vmul.f32 %v447, %v505
        %vm507 = vcmp.eq.f32.partialorder %v447, inf
        %v508 = vsel %vm507, %v447, %v506
        %vm509 = vcmp.eq.f32.partialorder %v447, 0.0
        %v510 = vand.u32 %v447, 2147483648
        %v511 = vsel %vm509, %v510, %v508
        %v512 = vrsqrt.pop %v448
        %v513 = vmul.f32 %v448, %v512
        %vm514 = vcmp.eq.f32.partialorder %v448, inf
        %v515 = vsel %vm514, %v448, %v513
        %vm516 = vcmp.eq.f32.partialorder %v448, 0.0
        %v517 = vand.u32 %v448, 2147483648
        %v518 = vsel %vm516, %v517, %v515
        %v519 = vrsqrt.pop %v449
        %v520 = vmul.f32 %v449, %v519
        %vm521 = vcmp.eq.f32.partialorder %v449, inf
        %v522 = vsel %vm521, %v449, %v520
        %vm523 = vcmp.eq.f32.partialorder %v449, 0.0
        %v524 = vand.u32 %v449, 2147483648
        %v525 = vsel %vm523, %v524, %v522
        %v526 = vrsqrt.pop %v450
        %v527 = vmul.f32 %v450, %v526
        %vm528 = vcmp.eq.f32.partialorder %v450, inf
        %v529 = vsel %vm528, %v450, %v527
        %vm530 = vcmp.eq.f32.partialorder %v450, 0.0
        %v531 = vand.u32 %v450, 2147483648
        %v532 = vsel %vm530, %v531, %v529
        %v533 = vrsqrt.pop %v451
        %v534 = vmul.f32 %v451, %v533
        %vm535 = vcmp.eq.f32.partialorder %v451, inf
        %v536 = vsel %vm535, %v451, %v534
        %vm537 = vcmp.eq.f32.partialorder %v451, 0.0
        %v538 = vand.u32 %v451, 2147483648
        %v539 = vsel %vm537, %v538, %v536
        %v540 = vrsqrt.pop %v452
        %v541 = vmul.f32 %v452, %v540
        %vm542 = vcmp.eq.f32.partialorder %v452, inf
        %v543 = vsel %vm542, %v452, %v541
        %vm544 = vcmp.eq.f32.partialorder %v452, 0.0
        %v545 = vand.u32 %v452, 2147483648
        %v546 = vsel %vm544, %v545, %v543
        %v547 = vrsqrt.pop %v453
        %v548 = vmul.f32 %v453, %v547
        %vm549 = vcmp.eq.f32.partialorder %v453, inf
        %v550 = vsel %vm549, %v453, %v548
        %vm551 = vcmp.eq.f32.partialorder %v453, 0.0
        %v552 = vand.u32 %v453, 2147483648
        %v553 = vsel %vm551, %v552, %v550
        %v554 = vrsqrt.pop %v454
        %v555 = vmul.f32 %v454, %v554
        %vm556 = vcmp.eq.f32.partialorder %v454, inf
        %v557 = vsel %vm556, %v454, %v555
        %vm558 = vcmp.eq.f32.partialorder %v454, 0.0
        %v559 = vand.u32 %v454, 2147483648
        %v560 = vsel %vm558, %v559, %v557
        %v561 = vrsqrt.pop %v455
        %v562 = vmul.f32 %v455, %v561
        %vm563 = vcmp.eq.f32.partialorder %v455, inf
        %v564 = vsel %vm563, %v455, %v562
        %vm565 = vcmp.eq.f32.partialorder %v455, 0.0
        %v566 = vand.u32 %v455, 2147483648
        %v567 = vsel %vm565, %v566, %v564
        %v568 = vadd.f32 %v462, 1e-06
        %v569 = vadd.f32 %v469, 1e-06
        %v570 = vadd.f32 %v476, 1e-06
        %v571 = vadd.f32 %v483, 1e-06
        %v572 = vadd.f32 %v490, 1e-06
        %v573 = vadd.f32 %v497, 1e-06
        %v574 = vadd.f32 %v504, 1e-06
        %v575 = vadd.f32 %v511, 1e-06
        %v576 = vadd.f32 %v518, 1e-06
        %v577 = vadd.f32 %v525, 1e-06
        %v578 = vadd.f32 %v532, 1e-06
        %v579 = vadd.f32 %v539, 1e-06
        %v580 = vadd.f32 %v546, 1e-06
        %v581 = vadd.f32 %v553, 1e-06
        %v582 = vadd.f32 %v560, 1e-06
        %v583 = vadd.f32 %v567, 1e-06
        %v584 = vrcp.pop %v568
        %v585 = vmul.f32 1.0, %v584
        %v586 = vrcp.pop %v569
        %v587 = vmul.f32 1.0, %v586
        %v588 = vrcp.pop %v570
        %v589 = vmul.f32 1.0, %v588
        %v590 = vrcp.pop %v571
        %v591 = vmul.f32 1.0, %v590
        %v592 = vrcp.pop %v572
        %v593 = vmul.f32 1.0, %v592
        %v594 = vrcp.pop %v573
        %v595 = vmul.f32 1.0, %v594
        %v596 = vrcp.pop %v574
        %v597 = vmul.f32 1.0, %v596
        %v598 = vrcp.pop %v575
        %v599 = vmul.f32 1.0, %v598
        %v600 = vrcp.pop %v576
        %v601 = vmul.f32 1.0, %v600
        %v602 = vrcp.pop %v577
        %v603 = vmul.f32 1.0, %v602
        %v604 = vrcp.pop %v578
        %v605 = vmul.f32 1.0, %v604
        %v606 = vrcp.pop %v579
        %v607 = vmul.f32 1.0, %v606
        %v608 = vrcp.pop %v580
        %v609 = vmul.f32 1.0, %v608
        %v610 = vrcp.pop %v581
        %v611 = vmul.f32 1.0, %v610
        %v612 = vrcp.pop %v582
        %v613 = vmul.f32 1.0, %v612
        %v614 = vrcp.pop %v583
        %v615 = vmul.f32 1.0, %v614
        %v616 = vsub.f32 %v260, %v312
        %v617 = vsub.f32 %v261, %v313
        %v618 = vsub.f32 %v262, %v314
        %v619 = vsub.f32 %v263, %v315
        %v620 = vsub.f32 %v264, %v316
        %v621 = vsub.f32 %v265, %v317
        %v622 = vsub.f32 %v266, %v318
        %v623 = vsub.f32 %v267, %v319
        %v624 = vsub.f32 %v268, %v320
        %v625 = vsub.f32 %v269, %v321
        %v626 = vsub.f32 %v270, %v322
        %v627 = vsub.f32 %v271, %v323
        %v628 = vsub.f32 %v272, %v324
        %v629 = vsub.f32 %v273, %v325
        %v630 = vsub.f32 %v274, %v326
        %v631 = vsub.f32 %v275, %v327
        %v632 = vmul.f32 %v616, %v585
        %v633 = vmul.f32 %v617, %v587
        %v634 = vmul.f32 %v618, %v589
        %v635 = vmul.f32 %v619, %v591
        %v636 = vmul.f32 %v620, %v593
        %v637 = vmul.f32 %v621, %v595
        %v638 = vmul.f32 %v622, %v597
        %v639 = vmul.f32 %v623, %v599
        %v640 = vmul.f32 %v624, %v601
        %v641 = vmul.f32 %v625, %v603
        %v642 = vmul.f32 %v626, %v605
        %v643 = vmul.f32 %v627, %v607
        %v644 = vmul.f32 %v628, %v609
        %v645 = vmul.f32 %v629, %v611
        %v646 = vmul.f32 %v630, %v613
        %v647 = vmul.f32 %v631, %v615
        %v649 = vlaneseq
        %v650 = vshrl.u32 %v649, 7
        %v651 = vsub.s32 0, %v650
        %v652 = vrot.slane %v276, %v651
        %v654 = vmul.f32 %v652, %v632
        %v655 = vmul.f32 %v652, %v633
        %v656 = vmul.f32 %v652, %v634
        %v657 = vmul.f32 %v652, %v635
        %v658 = vmul.f32 %v652, %v636
        %v659 = vmul.f32 %v652, %v637
        %v660 = vmul.f32 %v652, %v638
        %v661 = vmul.f32 %v652, %v639
        %v662 = vmul.f32 %v652, %v640
        %v663 = vmul.f32 %v652, %v641
        %v664 = vmul.f32 %v652, %v642
        %v665 = vmul.f32 %v652, %v643
        %v666 = vmul.f32 %v652, %v644
        %v667 = vmul.f32 %v652, %v645
        %v668 = vmul.f32 %v652, %v646
        %v669 = vmul.f32 %v652, %v647
        %v671 = vlaneseq
        %v672 = vshrl.u32 %v671, 7
        %v673 = vsub.s32 0, %v672
        %v674 = vrot.slane %v277, %v673
        %v676 = vadd.f32 %v654, %v674
        %v677 = vadd.f32 %v655, %v674
        %v678 = vadd.f32 %v656, %v674
        %v679 = vadd.f32 %v657, %v674
        %v680 = vadd.f32 %v658, %v674
        %v681 = vadd.f32 %v659, %v674
        %v682 = vadd.f32 %v660, %v674
        %v683 = vadd.f32 %v661, %v674
        %v684 = vadd.f32 %v662, %v674
        %v685 = vadd.f32 %v663, %v674
        %v686 = vadd.f32 %v664, %v674
        %v687 = vadd.f32 %v665, %v674
        %v688 = vadd.f32 %v666, %v674
        %v689 = vadd.f32 %v667, %v674
        %v690 = vadd.f32 %v668, %v674
        %v691 = vadd.f32 %v669, %v674
        %v692 = vld [vmem:[#allocation5] sm:$0xff]
        %v693 = vld [vmem:[#allocation5 + $0x8] sm:$0xff]
        %v694 = vld [vmem:[#allocation5 + $0x10] sm:$0xff]
        %v695 = vld [vmem:[#allocation5 + $0x18] sm:$0xff]
        %v696 = vld [vmem:[#allocation5 + $0x20] sm:$0xff]
        %v697 = vld [vmem:[#allocation5 + $0x28] sm:$0xff]
        %v698 = vld [vmem:[#allocation5 + $0x30] sm:$0xff]
        %v699 = vld [vmem:[#allocation5 + $0x38] sm:$0xff]
        %v700 = vld [vmem:[#allocation5 + $0x40] sm:$0xff]
        %v701 = vld [vmem:[#allocation5 + $0x48] sm:$0xff]
        %v702 = vld [vmem:[#allocation5 + $0x50] sm:$0xff]
        %v703 = vld [vmem:[#allocation5 + $0x58] sm:$0xff]
        %v704 = vld [vmem:[#allocation5 + $0x60] sm:$0xff]
        %v705 = vld [vmem:[#allocation5 + $0x68] sm:$0xff]
        %v706 = vld [vmem:[#allocation5 + $0x70] sm:$0xff]
        %v707 = vld [vmem:[#allocation5 + $0x78] sm:$0xff]
        %708 = vmatprep.subr.mxu0 0.0
        %v709 = vand.u32 %v707, 4294901760
        %710 = vmatpush1.msra.mxu0 %v709
        %711 = vmatprep.subr.mxu0 0.0
        %v712 = vand.u32 %v706, 4294901760
        %713 = vmatpush1.msra.mxu0 %v712
        %714 = vmatprep.subr.mxu0 0.0
        %v715 = vand.u32 %v705, 4294901760
        %716 = vmatpush1.msra.mxu0 %v715
        %717 = vmatprep.subr.mxu0 0.0
        %v718 = vand.u32 %v704, 4294901760
        %719 = vmatpush1.msra.mxu0 %v718
        %720 = vmatprep.subr.mxu0 0.0
        %v721 = vand.u32 %v703, 4294901760
        %722 = vmatpush1.msra.mxu0 %v721
        %723 = vmatprep.subr.mxu0 0.0
        %v724 = vand.u32 %v702, 4294901760
        %725 = vmatpush1.msra.mxu0 %v724
        %726 = vmatprep.subr.mxu0 0.0
        %v727 = vand.u32 %v701, 4294901760
        %728 = vmatpush1.msra.mxu0 %v727
        %729 = vmatprep.subr.mxu0 0.0
        %v730 = vand.u32 %v700, 4294901760
        %731 = vmatpush1.msra.mxu0 %v730
        %732 = vmatprep.subr.mxu0 0.0
        %v733 = vand.u32 %v699, 4294901760
        %734 = vmatpush1.msra.mxu0 %v733
        %735 = vmatprep.subr.mxu0 0.0
        %v736 = vand.u32 %v698, 4294901760
        %737 = vmatpush1.msra.mxu0 %v736
        %738 = vmatprep.subr.mxu0 0.0
        %v739 = vand.u32 %v697, 4294901760
        %740 = vmatpush1.msra.mxu0 %v739
        %741 = vmatprep.subr.mxu0 0.0
        %v742 = vand.u32 %v696, 4294901760
        %743 = vmatpush1.msra.mxu0 %v742
        %744 = vmatprep.subr.mxu0 0.0
        %v745 = vand.u32 %v695, 4294901760
        %746 = vmatpush1.msra.mxu0 %v745
        %747 = vmatprep.subr.mxu0 0.0
        %v748 = vand.u32 %v694, 4294901760
        %749 = vmatpush1.msra.mxu0 %v748
        %750 = vmatprep.subr.mxu0 0.0
        %v751 = vand.u32 %v693, 4294901760
        %752 = vmatpush1.msra.mxu0 %v751
        %753 = vmatprep.subr.mxu0 0.0
        %v754 = vand.u32 %v692, 4294901760
        %755 = vmatpush1.msra.mxu0 %v754
        %756 = vmatprep.subr.mxu0 0.0
        %757 = vmatpush2.msra.mxu0 0.0
        %758 = vmatprep.subr.mxu0 0.0
        %759 = vmatpush2.msra.mxu0 0.0
        %760 = vmatprep.subr.mxu0 0.0
        %761 = vmatpush2.msra.mxu0 0.0
        %762 = vmatprep.subr.mxu0 0.0
        %763 = vmatpush2.msra.mxu0 0.0
        %764 = vmatprep.subr.mxu0 0.0
        %765 = vmatpush2.msra.mxu0 0.0
        %766 = vmatprep.subr.mxu0 0.0
        %767 = vmatpush2.msra.mxu0 0.0
        %768 = vmatprep.subr.mxu0 0.0
        %769 = vmatpush2.msra.mxu0 0.0
        %770 = vmatprep.subr.mxu0 0.0
        %771 = vmatpush2.msra.mxu0 0.0
        %772 = vmatprep.subr.mxu0 0.0
        %773 = vmatpush2.msra.mxu0 0.0
        %774 = vmatprep.subr.mxu0 0.0
        %775 = vmatpush2.msra.mxu0 0.0
        %776 = vmatprep.subr.mxu0 0.0
        %777 = vmatpush2.msra.mxu0 0.0
        %778 = vmatprep.subr.mxu0 0.0
        %779 = vmatpush2.msra.mxu0 0.0
        %780 = vmatprep.subr.mxu0 0.0
        %781 = vmatpush2.msra.mxu0 0.0
        %782 = vmatprep.subr.mxu0 0.0
        %783 = vmatpush2.msra.mxu0 0.0
        %784 = vmatprep.subr.mxu0 0.0
        %785 = vmatpush2.msra.mxu0 0.0
        %786 = vmatprep.subr.mxu0 0.0
        %787 = vmatpush2.msra.mxu0 0.0
        %788 = vmatprep.mubr.f32.mxu0 0.0
        %v789 = vand.u32 %v676, 4294901760
        %v790 = vsub.f32 %v676, %v789
        %v791 = vand.u32 %v790, 4294901760
        %v792 = vsub.f32 %v790, %v791
        %v793 = vand.u32 %v792, 4294901760
        %794 = vmatmul.mubr.f32.gmra.mxu0 %v793
        %v795 = vpop.f32.mrf.mxu0
        %v796 = vadd.f32 0.0, %v795
        %v797 = vpop.f32.mrf.mxu0
        %798 = vmatprep.mubr.f32.mxu0 0.0
        %v799 = vand.u32 %v677, 4294901760
        %v800 = vsub.f32 %v677, %v799
        %v801 = vand.u32 %v800, 4294901760
        %v802 = vsub.f32 %v800, %v801
        %v803 = vand.u32 %v802, 4294901760
        %804 = vmatmul.mubr.f32.gmra.mxu0 %v803
        %v805 = vpop.f32.mrf.mxu0
        %v806 = vadd.f32 0.0, %v805
        %v807 = vpop.f32.mrf.mxu0
        %808 = vmatprep.mubr.f32.mxu0 0.0
        %v809 = vand.u32 %v678, 4294901760
        %v810 = vsub.f32 %v678, %v809
        %v811 = vand.u32 %v810, 4294901760
        %v812 = vsub.f32 %v810, %v811
        %v813 = vand.u32 %v812, 4294901760
        %814 = vmatmul.mubr.f32.gmra.mxu0 %v813
        %v815 = vpop.f32.mrf.mxu0
        %v816 = vadd.f32 0.0, %v815
        %v817 = vpop.f32.mrf.mxu0
        %818 = vmatprep.mubr.f32.mxu0 0.0
        %v819 = vand.u32 %v679, 4294901760
        %v820 = vsub.f32 %v679, %v819
        %v821 = vand.u32 %v820, 4294901760
        %v822 = vsub.f32 %v820, %v821
        %v823 = vand.u32 %v822, 4294901760
        %824 = vmatmul.mubr.f32.gmra.mxu0 %v823
        %v825 = vpop.f32.mrf.mxu0
        %v826 = vadd.f32 0.0, %v825
        %v827 = vpop.f32.mrf.mxu0
        %828 = vmatprep.mubr.f32.mxu0 0.0
        %v829 = vand.u32 %v680, 4294901760
        %v830 = vsub.f32 %v680, %v829
        %v831 = vand.u32 %v830, 4294901760
        %v832 = vsub.f32 %v830, %v831
        %v833 = vand.u32 %v832, 4294901760
        %834 = vmatmul.mubr.f32.gmra.mxu0 %v833
        %v835 = vpop.f32.mrf.mxu0
        %v836 = vadd.f32 0.0, %v835
        %v837 = vpop.f32.mrf.mxu0
        %838 = vmatprep.mubr.f32.mxu0 0.0
        %v839 = vand.u32 %v681, 4294901760
        %v840 = vsub.f32 %v681, %v839
        %v841 = vand.u32 %v840, 4294901760
        %v842 = vsub.f32 %v840, %v841
        %v843 = vand.u32 %v842, 4294901760
        %844 = vmatmul.mubr.f32.gmra.mxu0 %v843
        %v845 = vpop.f32.mrf.mxu0
        %v846 = vadd.f32 0.0, %v845
        %v847 = vpop.f32.mrf.mxu0
        %848 = vmatprep.mubr.f32.mxu0 0.0
        %v849 = vand.u32 %v682, 4294901760
        %v850 = vsub.f32 %v682, %v849
        %v851 = vand.u32 %v850, 4294901760
        %v852 = vsub.f32 %v850, %v851
        %v853 = vand.u32 %v852, 4294901760
        %854 = vmatmul.mubr.f32.gmra.mxu0 %v853
        %v855 = vpop.f32.mrf.mxu0
        %v856 = vadd.f32 0.0, %v855
        %v857 = vpop.f32.mrf.mxu0
        %858 = vmatprep.mubr.f32.mxu0 0.0
        %v859 = vand.u32 %v683, 4294901760
        %v860 = vsub.f32 %v683, %v859
        %v861 = vand.u32 %v860, 4294901760
        %v862 = vsub.f32 %v860, %v861
        %v863 = vand.u32 %v862, 4294901760
        %864 = vmatmul.mubr.f32.gmra.mxu0 %v863
        %v865 = vpop.f32.mrf.mxu0
        %v866 = vadd.f32 0.0, %v865
        %v867 = vpop.f32.mrf.mxu0
        %868 = vmatprep.mubr.f32.mxu0 0.0
        %v869 = vand.u32 %v684, 4294901760
        %v870 = vsub.f32 %v684, %v869
        %v871 = vand.u32 %v870, 4294901760
        %v872 = vsub.f32 %v870, %v871
        %v873 = vand.u32 %v872, 4294901760
        %874 = vmatmul.mubr.f32.gmra.mxu0 %v873
        %v875 = vpop.f32.mrf.mxu0
        %v876 = vadd.f32 0.0, %v875
        %v877 = vpop.f32.mrf.mxu0
        %878 = vmatprep.mubr.f32.mxu0 0.0
        %v879 = vand.u32 %v685, 4294901760
        %v880 = vsub.f32 %v685, %v879
        %v881 = vand.u32 %v880, 4294901760
        %v882 = vsub.f32 %v880, %v881
        %v883 = vand.u32 %v882, 4294901760
        %884 = vmatmul.mubr.f32.gmra.mxu0 %v883
        %v885 = vpop.f32.mrf.mxu0
        %v886 = vadd.f32 0.0, %v885
        %v887 = vpop.f32.mrf.mxu0
        %888 = vmatprep.mubr.f32.mxu0 0.0
        %v889 = vand.u32 %v686, 4294901760
        %v890 = vsub.f32 %v686, %v889
        %v891 = vand.u32 %v890, 4294901760
        %v892 = vsub.f32 %v890, %v891
        %v893 = vand.u32 %v892, 4294901760
        %894 = vmatmul.mubr.f32.gmra.mxu0 %v893
        %v895 = vpop.f32.mrf.mxu0
        %v896 = vadd.f32 0.0, %v895
        %v897 = vpop.f32.mrf.mxu0
        %898 = vmatprep.mubr.f32.mxu0 0.0
        %v899 = vand.u32 %v687, 4294901760
        %v900 = vsub.f32 %v687, %v899
        %v901 = vand.u32 %v900, 4294901760
        %v902 = vsub.f32 %v900, %v901
        %v903 = vand.u32 %v902, 4294901760
        %904 = vmatmul.mubr.f32.gmra.mxu0 %v903
        %v905 = vpop.f32.mrf.mxu0
        %v906 = vadd.f32 0.0, %v905
        %v907 = vpop.f32.mrf.mxu0
        %908 = vmatprep.mubr.f32.mxu0 0.0
        %v909 = vand.u32 %v688, 4294901760
        %v910 = vsub.f32 %v688, %v909
        %v911 = vand.u32 %v910, 4294901760
        %v912 = vsub.f32 %v910, %v911
        %v913 = vand.u32 %v912, 4294901760
        %914 = vmatmul.mubr.f32.gmra.mxu0 %v913
        %v915 = vpop.f32.mrf.mxu0
        %v916 = vadd.f32 0.0, %v915
        %v917 = vpop.f32.mrf.mxu0
        %918 = vmatprep.mubr.f32.mxu0 0.0
        %v919 = vand.u32 %v689, 4294901760
        %v920 = vsub.f32 %v689, %v919
        %v921 = vand.u32 %v920, 4294901760
        %v922 = vsub.f32 %v920, %v921
        %v923 = vand.u32 %v922, 4294901760
        %924 = vmatmul.mubr.f32.gmra.mxu0 %v923
        %v925 = vpop.f32.mrf.mxu0
        %v926 = vadd.f32 0.0, %v925
        %v927 = vpop.f32.mrf.mxu0
        %928 = vmatprep.mubr.f32.mxu0 0.0
        %v929 = vand.u32 %v690, 4294901760
        %v930 = vsub.f32 %v690, %v929
        %v931 = vand.u32 %v930, 4294901760
        %v932 = vsub.f32 %v930, %v931
        %v933 = vand.u32 %v932, 4294901760
        %934 = vmatmul.mubr.f32.gmra.mxu0 %v933
        %v935 = vpop.f32.mrf.mxu0
        %v936 = vadd.f32 0.0, %v935
        %v937 = vpop.f32.mrf.mxu0
        %938 = vmatprep.mubr.f32.mxu0 0.0
        %v939 = vand.u32 %v691, 4294901760
        %v940 = vsub.f32 %v691, %v939
        %v941 = vand.u32 %v940, 4294901760
        %v942 = vsub.f32 %v940, %v941
        %v943 = vand.u32 %v942, 4294901760
        %944 = vmatmul.mubr.f32.gmra.mxu0 %v943
        %v945 = vpop.f32.mrf.mxu0
        %v946 = vadd.f32 0.0, %v945
        %v947 = vpop.f32.mrf.mxu0
        %948 = vdwg.mxu0
        %949 = vmatprep.subr.mxu0 0.0
        %v950 = vand.u32 %v707, 4294901760
        %v951 = vsub.f32 %v707, %v950
        %v952 = vand.u32 %v951, 4294901760
        %v953 = vsub.f32 %v951, %v952
        %v954 = vand.u32 %v953, 4294901760
        %955 = vmatpush1.msra.mxu0 %v954
        %956 = vmatprep.subr.mxu0 0.0
        %v957 = vand.u32 %v706, 4294901760
        %v958 = vsub.f32 %v706, %v957
        %v959 = vand.u32 %v958, 4294901760
        %v960 = vsub.f32 %v958, %v959
        %v961 = vand.u32 %v960, 4294901760
        %962 = vmatpush1.msra.mxu0 %v961
        %963 = vmatprep.subr.mxu0 0.0
        %v964 = vand.u32 %v705, 4294901760
        %v965 = vsub.f32 %v705, %v964
        %v966 = vand.u32 %v965, 4294901760
        %v967 = vsub.f32 %v965, %v966
        %v968 = vand.u32 %v967, 4294901760
        %969 = vmatpush1.msra.mxu0 %v968
        %970 = vmatprep.subr.mxu0 0.0
        %v971 = vand.u32 %v704, 4294901760
        %v972 = vsub.f32 %v704, %v971
        %v973 = vand.u32 %v972, 4294901760
        %v974 = vsub.f32 %v972, %v973
        %v975 = vand.u32 %v974, 4294901760
        %976 = vmatpush1.msra.mxu0 %v975
        %977 = vmatprep.subr.mxu0 0.0
        %v978 = vand.u32 %v703, 4294901760
        %v979 = vsub.f32 %v703, %v978
        %v980 = vand.u32 %v979, 4294901760
        %v981 = vsub.f32 %v979, %v980
        %v982 = vand.u32 %v981, 4294901760
        %983 = vmatpush1.msra.mxu0 %v982
        %984 = vmatprep.subr.mxu0 0.0
        %v985 = vand.u32 %v702, 4294901760
        %v986 = vsub.f32 %v702, %v985
        %v987 = vand.u32 %v986, 4294901760
        %v988 = vsub.f32 %v986, %v987
        %v989 = vand.u32 %v988, 4294901760
        %990 = vmatpush1.msra.mxu0 %v989
        %991 = vmatprep.subr.mxu0 0.0
        %v992 = vand.u32 %v701, 4294901760
        %v993 = vsub.f32 %v701, %v992
        %v994 = vand.u32 %v993, 4294901760
        %v995 = vsub.f32 %v993, %v994
        %v996 = vand.u32 %v995, 4294901760
        %997 = vmatpush1.msra.mxu0 %v996
        %998 = vmatprep.subr.mxu0 0.0
        %v999 = vand.u32 %v700, 4294901760
        %v1000 = vsub.f32 %v700, %v999
        %v1001 = vand.u32 %v1000, 4294901760
        %v1002 = vsub.f32 %v1000, %v1001
        %v1003 = vand.u32 %v1002, 4294901760
        %1004 = vmatpush1.msra.mxu0 %v1003
        %1005 = vmatprep.subr.mxu0 0.0
        %v1006 = vand.u32 %v699, 4294901760
        %v1007 = vsub.f32 %v699, %v1006
        %v1008 = vand.u32 %v1007, 4294901760
        %v1009 = vsub.f32 %v1007, %v1008
        %v1010 = vand.u32 %v1009, 4294901760
        %1011 = vmatpush1.msra.mxu0 %v1010
        %1012 = vmatprep.subr.mxu0 0.0
        %v1013 = vand.u32 %v698, 4294901760
        %v1014 = vsub.f32 %v698, %v1013
        %v1015 = vand.u32 %v1014, 4294901760
        %v1016 = vsub.f32 %v1014, %v1015
        %v1017 = vand.u32 %v1016, 4294901760
        %1018 = vmatpush1.msra.mxu0 %v1017
        %1019 = vmatprep.subr.mxu0 0.0
        %v1020 = vand.u32 %v697, 4294901760
        %v1021 = vsub.f32 %v697, %v1020
        %v1022 = vand.u32 %v1021, 4294901760
        %v1023 = vsub.f32 %v1021, %v1022
        %v1024 = vand.u32 %v1023, 4294901760
        %1025 = vmatpush1.msra.mxu0 %v1024
        %1026 = vmatprep.subr.mxu0 0.0
        %v1027 = vand.u32 %v696, 4294901760
        %v1028 = vsub.f32 %v696, %v1027
        %v1029 = vand.u32 %v1028, 4294901760
        %v1030 = vsub.f32 %v1028, %v1029
        %v1031 = vand.u32 %v1030, 4294901760
        %1032 = vmatpush1.msra.mxu0 %v1031
        %1033 = vmatprep.subr.mxu0 0.0
        %v1034 = vand.u32 %v695, 4294901760
        %v1035 = vsub.f32 %v695, %v1034
        %v1036 = vand.u32 %v1035, 4294901760
        %v1037 = vsub.f32 %v1035, %v1036
        %v1038 = vand.u32 %v1037, 4294901760
        %1039 = vmatpush1.msra.mxu0 %v1038
        %1040 = vmatprep.subr.mxu0 0.0
        %v1041 = vand.u32 %v694, 4294901760
        %v1042 = vsub.f32 %v694, %v1041
        %v1043 = vand.u32 %v1042, 4294901760
        %v1044 = vsub.f32 %v1042, %v1043
        %v1045 = vand.u32 %v1044, 4294901760
        %1046 = vmatpush1.msra.mxu0 %v1045
        %1047 = vmatprep.subr.mxu0 0.0
        %v1048 = vand.u32 %v693, 4294901760
        %v1049 = vsub.f32 %v693, %v1048
        %v1050 = vand.u32 %v1049, 4294901760
        %v1051 = vsub.f32 %v1049, %v1050
        %v1052 = vand.u32 %v1051, 4294901760
        %1053 = vmatpush1.msra.mxu0 %v1052
        %1054 = vmatprep.subr.mxu0 0.0
        %v1055 = vand.u32 %v692, 4294901760
        %v1056 = vsub.f32 %v692, %v1055
        %v1057 = vand.u32 %v1056, 4294901760
        %v1058 = vsub.f32 %v1056, %v1057
        %v1059 = vand.u32 %v1058, 4294901760
        %1060 = vmatpush1.msra.mxu0 %v1059
        %1061 = vmatprep.subr.mxu0 0.0
        %1062 = vmatpush2.msra.mxu0 0.0
        %1063 = vmatprep.subr.mxu0 0.0
        %1064 = vmatpush2.msra.mxu0 0.0
        %1065 = vmatprep.subr.mxu0 0.0
        %1066 = vmatpush2.msra.mxu0 0.0
        %1067 = vmatprep.subr.mxu0 0.0
        %1068 = vmatpush2.msra.mxu0 0.0
        %1069 = vmatprep.subr.mxu0 0.0
        %1070 = vmatpush2.msra.mxu0 0.0
        %1071 = vmatprep.subr.mxu0 0.0
        %1072 = vmatpush2.msra.mxu0 0.0
        %1073 = vmatprep.subr.mxu0 0.0
        %1074 = vmatpush2.msra.mxu0 0.0
        %1075 = vmatprep.subr.mxu0 0.0
        %1076 = vmatpush2.msra.mxu0 0.0
        %1077 = vmatprep.subr.mxu0 0.0
        %1078 = vmatpush2.msra.mxu0 0.0
        %1079 = vmatprep.subr.mxu0 0.0
        %1080 = vmatpush2.msra.mxu0 0.0
        %1081 = vmatprep.subr.mxu0 0.0
        %1082 = vmatpush2.msra.mxu0 0.0
        %1083 = vmatprep.subr.mxu0 0.0
        %1084 = vmatpush2.msra.mxu0 0.0
        %1085 = vmatprep.subr.mxu0 0.0
        %1086 = vmatpush2.msra.mxu0 0.0
        %1087 = vmatprep.subr.mxu0 0.0
        %1088 = vmatpush2.msra.mxu0 0.0
        %1089 = vmatprep.subr.mxu0 0.0
        %1090 = vmatpush2.msra.mxu0 0.0
        %1091 = vmatprep.subr.mxu0 0.0
        %1092 = vmatpush2.msra.mxu0 0.0
        %1093 = vmatprep.mubr.f32.mxu0 0.0
        %v1094 = vand.u32 %v676, 4294901760
        %1095 = vmatmul.mubr.f32.gmra.mxu0 %v1094
        %v1096 = vpop.f32.mrf.mxu0
        %v1097 = vadd.f32 %v796, %v1096
        %v1098 = vpop.f32.mrf.mxu0
        %1099 = vmatprep.mubr.f32.mxu0 0.0
        %v1100 = vand.u32 %v677, 4294901760
        %1101 = vmatmul.mubr.f32.gmra.mxu0 %v1100
        %v1102 = vpop.f32.mrf.mxu0
        %v1103 = vadd.f32 %v806, %v1102
        %v1104 = vpop.f32.mrf.mxu0
        %1105 = vmatprep.mubr.f32.mxu0 0.0
        %v1106 = vand.u32 %v678, 4294901760
        %1107 = vmatmul.mubr.f32.gmra.mxu0 %v1106
        %v1108 = vpop.f32.mrf.mxu0
        %v1109 = vadd.f32 %v816, %v1108
        %v1110 = vpop.f32.mrf.mxu0
        %1111 = vmatprep.mubr.f32.mxu0 0.0
        %v1112 = vand.u32 %v679, 4294901760
        %1113 = vmatmul.mubr.f32.gmra.mxu0 %v1112
        %v1114 = vpop.f32.mrf.mxu0
        %v1115 = vadd.f32 %v826, %v1114
        %v1116 = vpop.f32.mrf.mxu0
        %1117 = vmatprep.mubr.f32.mxu0 0.0
        %v1118 = vand.u32 %v680, 4294901760
        %1119 = vmatmul.mubr.f32.gmra.mxu0 %v1118
        %v1120 = vpop.f32.mrf.mxu0
        %v1121 = vadd.f32 %v836, %v1120
        %v1122 = vpop.f32.mrf.mxu0
        %1123 = vmatprep.mubr.f32.mxu0 0.0
        %v1124 = vand.u32 %v681, 4294901760
        %1125 = vmatmul.mubr.f32.gmra.mxu0 %v1124
        %v1126 = vpop.f32.mrf.mxu0
        %v1127 = vadd.f32 %v846, %v1126
        %v1128 = vpop.f32.mrf.mxu0
        %1129 = vmatprep.mubr.f32.mxu0 0.0
        %v1130 = vand.u32 %v682, 4294901760
        %1131 = vmatmul.mubr.f32.gmra.mxu0 %v1130
        %v1132 = vpop.f32.mrf.mxu0
        %v1133 = vadd.f32 %v856, %v1132
        %v1134 = vpop.f32.mrf.mxu0
        %1135 = vmatprep.mubr.f32.mxu0 0.0
        %v1136 = vand.u32 %v683, 4294901760
        %1137 = vmatmul.mubr.f32.gmra.mxu0 %v1136
        %v1138 = vpop.f32.mrf.mxu0
        %v1139 = vadd.f32 %v866, %v1138
        %v1140 = vpop.f32.mrf.mxu0
        %1141 = vmatprep.mubr.f32.mxu0 0.0
        %v1142 = vand.u32 %v684, 4294901760
        %1143 = vmatmul.mubr.f32.gmra.mxu0 %v1142
        %v1144 = vpop.f32.mrf.mxu0
        %v1145 = vadd.f32 %v876, %v1144
        %v1146 = vpop.f32.mrf.mxu0
        %1147 = vmatprep.mubr.f32.mxu0 0.0
        %v1148 = vand.u32 %v685, 4294901760
        %1149 = vmatmul.mubr.f32.gmra.mxu0 %v1148
        %v1150 = vpop.f32.mrf.mxu0
        %v1151 = vadd.f32 %v886, %v1150
        %v1152 = vpop.f32.mrf.mxu0
        %1153 = vmatprep.mubr.f32.mxu0 0.0
        %v1154 = vand.u32 %v686, 4294901760
        %1155 = vmatmul.mubr.f32.gmra.mxu0 %v1154
        %v1156 = vpop.f32.mrf.mxu0
        %v1157 = vadd.f32 %v896, %v1156
        %v1158 = vpop.f32.mrf.mxu0
        %1159 = vmatprep.mubr.f32.mxu0 0.0
        %v1160 = vand.u32 %v687, 4294901760
        %1161 = vmatmul.mubr.f32.gmra.mxu0 %v1160
        %v1162 = vpop.f32.mrf.mxu0
        %v1163 = vadd.f32 %v906, %v1162
        %v1164 = vpop.f32.mrf.mxu0
        %1165 = vmatprep.mubr.f32.mxu0 0.0
        %v1166 = vand.u32 %v688, 4294901760
        %1167 = vmatmul.mubr.f32.gmra.mxu0 %v1166
        %v1168 = vpop.f32.mrf.mxu0
        %v1169 = vadd.f32 %v916, %v1168
        %v1170 = vpop.f32.mrf.mxu0
        %1171 = vmatprep.mubr.f32.mxu0 0.0
        %v1172 = vand.u32 %v689, 4294901760
        %1173 = vmatmul.mubr.f32.gmra.mxu0 %v1172
        %v1174 = vpop.f32.mrf.mxu0
        %v1175 = vadd.f32 %v926, %v1174
        %v1176 = vpop.f32.mrf.mxu0
        %1177 = vmatprep.mubr.f32.mxu0 0.0
        %v1178 = vand.u32 %v690, 4294901760
        %1179 = vmatmul.mubr.f32.gmra.mxu0 %v1178
        %v1180 = vpop.f32.mrf.mxu0
        %v1181 = vadd.f32 %v936, %v1180
        %v1182 = vpop.f32.mrf.mxu0
        %1183 = vmatprep.mubr.f32.mxu0 0.0
        %v1184 = vand.u32 %v691, 4294901760
        %1185 = vmatmul.mubr.f32.gmra.mxu0 %v1184
        %v1186 = vpop.f32.mrf.mxu0
        %v1187 = vadd.f32 %v946, %v1186
        %v1188 = vpop.f32.mrf.mxu0
        %1189 = vdwg.mxu0
        %1190 = vmatprep.subr.mxu0 0.0
        %v1191 = vand.u32 %v707, 4294901760
        %v1192 = vsub.f32 %v707, %v1191
        %1193 = vmatpush1.msra.mxu0 %v1192
        %1194 = vmatprep.subr.mxu0 0.0
        %v1195 = vand.u32 %v706, 4294901760
        %v1196 = vsub.f32 %v706, %v1195
        %1197 = vmatpush1.msra.mxu0 %v1196
        %1198 = vmatprep.subr.mxu0 0.0
        %v1199 = vand.u32 %v705, 4294901760
        %v1200 = vsub.f32 %v705, %v1199
        %1201 = vmatpush1.msra.mxu0 %v1200
        %1202 = vmatprep.subr.mxu0 0.0
        %v1203 = vand.u32 %v704, 4294901760
        %v1204 = vsub.f32 %v704, %v1203
        %1205 = vmatpush1.msra.mxu0 %v1204
        %1206 = vmatprep.subr.mxu0 0.0
        %v1207 = vand.u32 %v703, 4294901760
        %v1208 = vsub.f32 %v703, %v1207
        %1209 = vmatpush1.msra.mxu0 %v1208
        %1210 = vmatprep.subr.mxu0 0.0
        %v1211 = vand.u32 %v702, 4294901760
        %v1212 = vsub.f32 %v702, %v1211
        %1213 = vmatpush1.msra.mxu0 %v1212
        %1214 = vmatprep.subr.mxu0 0.0
        %v1215 = vand.u32 %v701, 4294901760
        %v1216 = vsub.f32 %v701, %v1215
        %1217 = vmatpush1.msra.mxu0 %v1216
        %1218 = vmatprep.subr.mxu0 0.0
        %v1219 = vand.u32 %v700, 4294901760
        %v1220 = vsub.f32 %v700, %v1219
        %1221 = vmatpush1.msra.mxu0 %v1220
        %1222 = vmatprep.subr.mxu0 0.0
        %v1223 = vand.u32 %v699, 4294901760
        %v1224 = vsub.f32 %v699, %v1223
        %1225 = vmatpush1.msra.mxu0 %v1224
        %1226 = vmatprep.subr.mxu0 0.0
        %v1227 = vand.u32 %v698, 4294901760
        %v1228 = vsub.f32 %v698, %v1227
        %1229 = vmatpush1.msra.mxu0 %v1228
        %1230 = vmatprep.subr.mxu0 0.0
        %v1231 = vand.u32 %v697, 4294901760
        %v1232 = vsub.f32 %v697, %v1231
        %1233 = vmatpush1.msra.mxu0 %v1232
        %1234 = vmatprep.subr.mxu0 0.0
        %v1235 = vand.u32 %v696, 4294901760
        %v1236 = vsub.f32 %v696, %v1235
        %1237 = vmatpush1.msra.mxu0 %v1236
        %1238 = vmatprep.subr.mxu0 0.0
        %v1239 = vand.u32 %v695, 4294901760
        %v1240 = vsub.f32 %v695, %v1239
        %1241 = vmatpush1.msra.mxu0 %v1240
        %1242 = vmatprep.subr.mxu0 0.0
        %v1243 = vand.u32 %v694, 4294901760
        %v1244 = vsub.f32 %v694, %v1243
        %1245 = vmatpush1.msra.mxu0 %v1244
        %1246 = vmatprep.subr.mxu0 0.0
        %v1247 = vand.u32 %v693, 4294901760
        %v1248 = vsub.f32 %v693, %v1247
        %1249 = vmatpush1.msra.mxu0 %v1248
        %1250 = vmatprep.subr.mxu0 0.0
        %v1251 = vand.u32 %v692, 4294901760
        %v1252 = vsub.f32 %v692, %v1251
        %1253 = vmatpush1.msra.mxu0 %v1252
        %1254 = vmatprep.subr.mxu0 0.0
        %1255 = vmatpush2.msra.mxu0 0.0
        %1256 = vmatprep.subr.mxu0 0.0
        %1257 = vmatpush2.msra.mxu0 0.0
        %1258 = vmatprep.subr.mxu0 0.0
        %1259 = vmatpush2.msra.mxu0 0.0
        %1260 = vmatprep.subr.mxu0 0.0
        %1261 = vmatpush2.msra.mxu0 0.0
        %1262 = vmatprep.subr.mxu0 0.0
        %1263 = vmatpush2.msra.mxu0 0.0
        %1264 = vmatprep.subr.mxu0 0.0
        %1265 = vmatpush2.msra.mxu0 0.0
        %1266 = vmatprep.subr.mxu0 0.0
        %1267 = vmatpush2.msra.mxu0 0.0
        %1268 = vmatprep.subr.mxu0 0.0
        %1269 = vmatpush2.msra.mxu0 0.0
        %1270 = vmatprep.subr.mxu0 0.0
        %1271 = vmatpush2.msra.mxu0 0.0
        %1272 = vmatprep.subr.mxu0 0.0
        %1273 = vmatpush2.msra.mxu0 0.0
        %1274 = vmatprep.subr.mxu0 0.0
        %1275 = vmatpush2.msra.mxu0 0.0
        %1276 = vmatprep.subr.mxu0 0.0
        %1277 = vmatpush2.msra.mxu0 0.0
        %1278 = vmatprep.subr.mxu0 0.0
        %1279 = vmatpush2.msra.mxu0 0.0
        %1280 = vmatprep.subr.mxu0 0.0
        %1281 = vmatpush2.msra.mxu0 0.0
        %1282 = vmatprep.subr.mxu0 0.0
        %1283 = vmatpush2.msra.mxu0 0.0
        %1284 = vmatprep.subr.mxu0 0.0
        %1285 = vmatpush2.msra.mxu0 0.0
        %1286 = vmatprep.mubr.f32.mxu0 0.0
        %v1287 = vand.u32 %v676, 4294901760
        %v1288 = vsub.f32 %v676, %v1287
        %1289 = vmatmul.mubr.f32.gmra.mxu0 %v1288
        %v1290 = vpop.f32.mrf.mxu0
        %v1291 = vadd.f32 %v1097, %v1290
        %v1292 = vpop.f32.mrf.mxu0
        %1293 = vmatprep.mubr.f32.mxu0 0.0
        %v1294 = vand.u32 %v677, 4294901760
        %v1295 = vsub.f32 %v677, %v1294
        %1296 = vmatmul.mubr.f32.gmra.mxu0 %v1295
        %v1297 = vpop.f32.mrf.mxu0
        %v1298 = vadd.f32 %v1103, %v1297
        %v1299 = vpop.f32.mrf.mxu0
        %1300 = vmatprep.mubr.f32.mxu0 0.0
        %v1301 = vand.u32 %v678, 4294901760
        %v1302 = vsub.f32 %v678, %v1301
        %1303 = vmatmul.mubr.f32.gmra.mxu0 %v1302
        %v1304 = vpop.f32.mrf.mxu0
        %v1305 = vadd.f32 %v1109, %v1304
        %v1306 = vpop.f32.mrf.mxu0
        %1307 = vmatprep.mubr.f32.mxu0 0.0
        %v1308 = vand.u32 %v679, 4294901760
        %v1309 = vsub.f32 %v679, %v1308
        %1310 = vmatmul.mubr.f32.gmra.mxu0 %v1309
        %v1311 = vpop.f32.mrf.mxu0
        %v1312 = vadd.f32 %v1115, %v1311
        %v1313 = vpop.f32.mrf.mxu0
        %1314 = vmatprep.mubr.f32.mxu0 0.0
        %v1315 = vand.u32 %v680, 4294901760
        %v1316 = vsub.f32 %v680, %v1315
        %1317 = vmatmul.mubr.f32.gmra.mxu0 %v1316
        %v1318 = vpop.f32.mrf.mxu0
        %v1319 = vadd.f32 %v1121, %v1318
        %v1320 = vpop.f32.mrf.mxu0
        %1321 = vmatprep.mubr.f32.mxu0 0.0
        %v1322 = vand.u32 %v681, 4294901760
        %v1323 = vsub.f32 %v681, %v1322
        %1324 = vmatmul.mubr.f32.gmra.mxu0 %v1323
        %v1325 = vpop.f32.mrf.mxu0
        %v1326 = vadd.f32 %v1127, %v1325
        %v1327 = vpop.f32.mrf.mxu0
        %1328 = vmatprep.mubr.f32.mxu0 0.0
        %v1329 = vand.u32 %v682, 4294901760
        %v1330 = vsub.f32 %v682, %v1329
        %1331 = vmatmul.mubr.f32.gmra.mxu0 %v1330
        %v1332 = vpop.f32.mrf.mxu0
        %v1333 = vadd.f32 %v1133, %v1332
        %v1334 = vpop.f32.mrf.mxu0
        %1335 = vmatprep.mubr.f32.mxu0 0.0
        %v1336 = vand.u32 %v683, 4294901760
        %v1337 = vsub.f32 %v683, %v1336
        %1338 = vmatmul.mubr.f32.gmra.mxu0 %v1337
        %v1339 = vpop.f32.mrf.mxu0
        %v1340 = vadd.f32 %v1139, %v1339
        %v1341 = vpop.f32.mrf.mxu0
        %1342 = vmatprep.mubr.f32.mxu0 0.0
        %v1343 = vand.u32 %v684, 4294901760
        %v1344 = vsub.f32 %v684, %v1343
        %1345 = vmatmul.mubr.f32.gmra.mxu0 %v1344
        %v1346 = vpop.f32.mrf.mxu0
        %v1347 = vadd.f32 %v1145, %v1346
        %v1348 = vpop.f32.mrf.mxu0
        %1349 = vmatprep.mubr.f32.mxu0 0.0
        %v1350 = vand.u32 %v685, 4294901760
        %v1351 = vsub.f32 %v685, %v1350
        %1352 = vmatmul.mubr.f32.gmra.mxu0 %v1351
        %v1353 = vpop.f32.mrf.mxu0
        %v1354 = vadd.f32 %v1151, %v1353
        %v1355 = vpop.f32.mrf.mxu0
        %1356 = vmatprep.mubr.f32.mxu0 0.0
        %v1357 = vand.u32 %v686, 4294901760
        %v1358 = vsub.f32 %v686, %v1357
        %1359 = vmatmul.mubr.f32.gmra.mxu0 %v1358
        %v1360 = vpop.f32.mrf.mxu0
        %v1361 = vadd.f32 %v1157, %v1360
        %v1362 = vpop.f32.mrf.mxu0
        %1363 = vmatprep.mubr.f32.mxu0 0.0
        %v1364 = vand.u32 %v687, 4294901760
        %v1365 = vsub.f32 %v687, %v1364
        %1366 = vmatmul.mubr.f32.gmra.mxu0 %v1365
        %v1367 = vpop.f32.mrf.mxu0
        %v1368 = vadd.f32 %v1163, %v1367
        %v1369 = vpop.f32.mrf.mxu0
        %1370 = vmatprep.mubr.f32.mxu0 0.0
        %v1371 = vand.u32 %v688, 4294901760
        %v1372 = vsub.f32 %v688, %v1371
        %1373 = vmatmul.mubr.f32.gmra.mxu0 %v1372
        %v1374 = vpop.f32.mrf.mxu0
        %v1375 = vadd.f32 %v1169, %v1374
        %v1376 = vpop.f32.mrf.mxu0
        %1377 = vmatprep.mubr.f32.mxu0 0.0
        %v1378 = vand.u32 %v689, 4294901760
        %v1379 = vsub.f32 %v689, %v1378
        %1380 = vmatmul.mubr.f32.gmra.mxu0 %v1379
        %v1381 = vpop.f32.mrf.mxu0
        %v1382 = vadd.f32 %v1175, %v1381
        %v1383 = vpop.f32.mrf.mxu0
        %1384 = vmatprep.mubr.f32.mxu0 0.0
        %v1385 = vand.u32 %v690, 4294901760
        %v1386 = vsub.f32 %v690, %v1385
        %1387 = vmatmul.mubr.f32.gmra.mxu0 %v1386
        %v1388 = vpop.f32.mrf.mxu0
        %v1389 = vadd.f32 %v1181, %v1388
        %v1390 = vpop.f32.mrf.mxu0
        %1391 = vmatprep.mubr.f32.mxu0 0.0
        %v1392 = vand.u32 %v691, 4294901760
        %v1393 = vsub.f32 %v691, %v1392
        %1394 = vmatmul.mubr.f32.gmra.mxu0 %v1393
        %v1395 = vpop.f32.mrf.mxu0
        %v1396 = vadd.f32 %v1187, %v1395
        %v1397 = vpop.f32.mrf.mxu0
        %1398 = vdwg.mxu0
        %1399 = vmatprep.subr.mxu0 0.0
        %v1400 = vand.u32 %v707, 4294901760
        %1401 = vmatpush1.msra.mxu0 %v1400
        %1402 = vmatprep.subr.mxu0 0.0
        %v1403 = vand.u32 %v706, 4294901760
        %1404 = vmatpush1.msra.mxu0 %v1403
        %1405 = vmatprep.subr.mxu0 0.0
        %v1406 = vand.u32 %v705, 4294901760
        %1407 = vmatpush1.msra.mxu0 %v1406
        %1408 = vmatprep.subr.mxu0 0.0
        %v1409 = vand.u32 %v704, 4294901760
        %1410 = vmatpush1.msra.mxu0 %v1409
        %1411 = vmatprep.subr.mxu0 0.0
        %v1412 = vand.u32 %v703, 4294901760
        %1413 = vmatpush1.msra.mxu0 %v1412
        %1414 = vmatprep.subr.mxu0 0.0
        %v1415 = vand.u32 %v702, 4294901760
        %1416 = vmatpush1.msra.mxu0 %v1415
        %1417 = vmatprep.subr.mxu0 0.0
        %v1418 = vand.u32 %v701, 4294901760
        %1419 = vmatpush1.msra.mxu0 %v1418
        %1420 = vmatprep.subr.mxu0 0.0
        %v1421 = vand.u32 %v700, 4294901760
        %1422 = vmatpush1.msra.mxu0 %v1421
        %1423 = vmatprep.subr.mxu0 0.0
        %v1424 = vand.u32 %v699, 4294901760
        %1425 = vmatpush1.msra.mxu0 %v1424
        %1426 = vmatprep.subr.mxu0 0.0
        %v1427 = vand.u32 %v698, 4294901760
        %1428 = vmatpush1.msra.mxu0 %v1427
        %1429 = vmatprep.subr.mxu0 0.0
        %v1430 = vand.u32 %v697, 4294901760
        %1431 = vmatpush1.msra.mxu0 %v1430
        %1432 = vmatprep.subr.mxu0 0.0
        %v1433 = vand.u32 %v696, 4294901760
        %1434 = vmatpush1.msra.mxu0 %v1433
        %1435 = vmatprep.subr.mxu0 0.0
        %v1436 = vand.u32 %v695, 4294901760
        %1437 = vmatpush1.msra.mxu0 %v1436
        %1438 = vmatprep.subr.mxu0 0.0
        %v1439 = vand.u32 %v694, 4294901760
        %1440 = vmatpush1.msra.mxu0 %v1439
        %1441 = vmatprep.subr.mxu0 0.0
        %v1442 = vand.u32 %v693, 4294901760
        %1443 = vmatpush1.msra.mxu0 %v1442
        %1444 = vmatprep.subr.mxu0 0.0
        %v1445 = vand.u32 %v692, 4294901760
        %1446 = vmatpush1.msra.mxu0 %v1445
        %1447 = vmatprep.subr.mxu0 0.0
        %1448 = vmatpush2.msra.mxu0 0.0
        %1449 = vmatprep.subr.mxu0 0.0
        %1450 = vmatpush2.msra.mxu0 0.0
        %1451 = vmatprep.subr.mxu0 0.0
        %1452 = vmatpush2.msra.mxu0 0.0
        %1453 = vmatprep.subr.mxu0 0.0
        %1454 = vmatpush2.msra.mxu0 0.0
        %1455 = vmatprep.subr.mxu0 0.0
        %1456 = vmatpush2.msra.mxu0 0.0
        %1457 = vmatprep.subr.mxu0 0.0
        %1458 = vmatpush2.msra.mxu0 0.0
        %1459 = vmatprep.subr.mxu0 0.0
        %1460 = vmatpush2.msra.mxu0 0.0
        %1461 = vmatprep.subr.mxu0 0.0
        %1462 = vmatpush2.msra.mxu0 0.0
        %1463 = vmatprep.subr.mxu0 0.0
        %1464 = vmatpush2.msra.mxu0 0.0
        %1465 = vmatprep.subr.mxu0 0.0
        %1466 = vmatpush2.msra.mxu0 0.0
        %1467 = vmatprep.subr.mxu0 0.0
        %1468 = vmatpush2.msra.mxu0 0.0
        %1469 = vmatprep.subr.mxu0 0.0
        %1470 = vmatpush2.msra.mxu0 0.0
        %1471 = vmatprep.subr.mxu0 0.0
        %1472 = vmatpush2.msra.mxu0 0.0
        %1473 = vmatprep.subr.mxu0 0.0
        %1474 = vmatpush2.msra.mxu0 0.0
        %1475 = vmatprep.subr.mxu0 0.0
        %1476 = vmatpush2.msra.mxu0 0.0
        %1477 = vmatprep.subr.mxu0 0.0
        %1478 = vmatpush2.msra.mxu0 0.0
        %1479 = vmatprep.mubr.f32.mxu0 0.0
        %v1480 = vand.u32 %v676, 4294901760
        %v1481 = vsub.f32 %v676, %v1480
        %v1482 = vand.u32 %v1481, 4294901760
        %1483 = vmatmul.mubr.f32.gmra.mxu0 %v1482
        %v1484 = vpop.f32.mrf.mxu0
        %v1485 = vadd.f32 %v1291, %v1484
        %v1486 = vpop.f32.mrf.mxu0
        %1487 = vmatprep.mubr.f32.mxu0 0.0
        %v1488 = vand.u32 %v677, 4294901760
        %v1489 = vsub.f32 %v677, %v1488
        %v1490 = vand.u32 %v1489, 4294901760
        %1491 = vmatmul.mubr.f32.gmra.mxu0 %v1490
        %v1492 = vpop.f32.mrf.mxu0
        %v1493 = vadd.f32 %v1298, %v1492
        %v1494 = vpop.f32.mrf.mxu0
        %1495 = vmatprep.mubr.f32.mxu0 0.0
        %v1496 = vand.u32 %v678, 4294901760
        %v1497 = vsub.f32 %v678, %v1496
        %v1498 = vand.u32 %v1497, 4294901760
        %1499 = vmatmul.mubr.f32.gmra.mxu0 %v1498
        %v1500 = vpop.f32.mrf.mxu0
        %v1501 = vadd.f32 %v1305, %v1500
        %v1502 = vpop.f32.mrf.mxu0
        %1503 = vmatprep.mubr.f32.mxu0 0.0
        %v1504 = vand.u32 %v679, 4294901760
        %v1505 = vsub.f32 %v679, %v1504
        %v1506 = vand.u32 %v1505, 4294901760
        %1507 = vmatmul.mubr.f32.gmra.mxu0 %v1506
        %v1508 = vpop.f32.mrf.mxu0
        %v1509 = vadd.f32 %v1312, %v1508
        %v1510 = vpop.f32.mrf.mxu0
        %1511 = vmatprep.mubr.f32.mxu0 0.0
        %v1512 = vand.u32 %v680, 4294901760
        %v1513 = vsub.f32 %v680, %v1512
        %v1514 = vand.u32 %v1513, 4294901760
        %1515 = vmatmul.mubr.f32.gmra.mxu0 %v1514
        %v1516 = vpop.f32.mrf.mxu0
        %v1517 = vadd.f32 %v1319, %v1516
        %v1518 = vpop.f32.mrf.mxu0
        %1519 = vmatprep.mubr.f32.mxu0 0.0
        %v1520 = vand.u32 %v681, 4294901760
        %v1521 = vsub.f32 %v681, %v1520
        %v1522 = vand.u32 %v1521, 4294901760
        %1523 = vmatmul.mubr.f32.gmra.mxu0 %v1522
        %v1524 = vpop.f32.mrf.mxu0
        %v1525 = vadd.f32 %v1326, %v1524
        %v1526 = vpop.f32.mrf.mxu0
        %1527 = vmatprep.mubr.f32.mxu0 0.0
        %v1528 = vand.u32 %v682, 4294901760
        %v1529 = vsub.f32 %v682, %v1528
        %v1530 = vand.u32 %v1529, 4294901760
        %1531 = vmatmul.mubr.f32.gmra.mxu0 %v1530
        %v1532 = vpop.f32.mrf.mxu0
        %v1533 = vadd.f32 %v1333, %v1532
        %v1534 = vpop.f32.mrf.mxu0
        %1535 = vmatprep.mubr.f32.mxu0 0.0
        %v1536 = vand.u32 %v683, 4294901760
        %v1537 = vsub.f32 %v683, %v1536
        %v1538 = vand.u32 %v1537, 4294901760
        %1539 = vmatmul.mubr.f32.gmra.mxu0 %v1538
        %v1540 = vpop.f32.mrf.mxu0
        %v1541 = vadd.f32 %v1340, %v1540
        %v1542 = vpop.f32.mrf.mxu0
        %1543 = vmatprep.mubr.f32.mxu0 0.0
        %v1544 = vand.u32 %v684, 4294901760
        %v1545 = vsub.f32 %v684, %v1544
        %v1546 = vand.u32 %v1545, 4294901760
        %1547 = vmatmul.mubr.f32.gmra.mxu0 %v1546
        %v1548 = vpop.f32.mrf.mxu0
        %v1549 = vadd.f32 %v1347, %v1548
        %v1550 = vpop.f32.mrf.mxu0
        %1551 = vmatprep.mubr.f32.mxu0 0.0
        %v1552 = vand.u32 %v685, 4294901760
        %v1553 = vsub.f32 %v685, %v1552
        %v1554 = vand.u32 %v1553, 4294901760
        %1555 = vmatmul.mubr.f32.gmra.mxu0 %v1554
        %v1556 = vpop.f32.mrf.mxu0
        %v1557 = vadd.f32 %v1354, %v1556
        %v1558 = vpop.f32.mrf.mxu0
        %1559 = vmatprep.mubr.f32.mxu0 0.0
        %v1560 = vand.u32 %v686, 4294901760
        %v1561 = vsub.f32 %v686, %v1560
        %v1562 = vand.u32 %v1561, 4294901760
        %1563 = vmatmul.mubr.f32.gmra.mxu0 %v1562
        %v1564 = vpop.f32.mrf.mxu0
        %v1565 = vadd.f32 %v1361, %v1564
        %v1566 = vpop.f32.mrf.mxu0
        %1567 = vmatprep.mubr.f32.mxu0 0.0
        %v1568 = vand.u32 %v687, 4294901760
        %v1569 = vsub.f32 %v687, %v1568
        %v1570 = vand.u32 %v1569, 4294901760
        %1571 = vmatmul.mubr.f32.gmra.mxu0 %v1570
        %v1572 = vpop.f32.mrf.mxu0
        %v1573 = vadd.f32 %v1368, %v1572
        %v1574 = vpop.f32.mrf.mxu0
        %1575 = vmatprep.mubr.f32.mxu0 0.0
        %v1576 = vand.u32 %v688, 4294901760
        %v1577 = vsub.f32 %v688, %v1576
        %v1578 = vand.u32 %v1577, 4294901760
        %1579 = vmatmul.mubr.f32.gmra.mxu0 %v1578
        %v1580 = vpop.f32.mrf.mxu0
        %v1581 = vadd.f32 %v1375, %v1580
        %v1582 = vpop.f32.mrf.mxu0
        %1583 = vmatprep.mubr.f32.mxu0 0.0
        %v1584 = vand.u32 %v689, 4294901760
        %v1585 = vsub.f32 %v689, %v1584
        %v1586 = vand.u32 %v1585, 4294901760
        %1587 = vmatmul.mubr.f32.gmra.mxu0 %v1586
        %v1588 = vpop.f32.mrf.mxu0
        %v1589 = vadd.f32 %v1382, %v1588
        %v1590 = vpop.f32.mrf.mxu0
        %1591 = vmatprep.mubr.f32.mxu0 0.0
        %v1592 = vand.u32 %v690, 4294901760
        %v1593 = vsub.f32 %v690, %v1592
        %v1594 = vand.u32 %v1593, 4294901760
        %1595 = vmatmul.mubr.f32.gmra.mxu0 %v1594
        %v1596 = vpop.f32.mrf.mxu0
        %v1597 = vadd.f32 %v1389, %v1596
        %v1598 = vpop.f32.mrf.mxu0
        %1599 = vmatprep.mubr.f32.mxu0 0.0
        %v1600 = vand.u32 %v691, 4294901760
        %v1601 = vsub.f32 %v691, %v1600
        %v1602 = vand.u32 %v1601, 4294901760
        %1603 = vmatmul.mubr.f32.gmra.mxu0 %v1602
        %v1604 = vpop.f32.mrf.mxu0
        %v1605 = vadd.f32 %v1396, %v1604
        %v1606 = vpop.f32.mrf.mxu0
        %1607 = vdwg.mxu0
        %1608 = vmatprep.subr.mxu0 0.0
        %v1609 = vand.u32 %v707, 4294901760
        %v1610 = vsub.f32 %v707, %v1609
        %v1611 = vand.u32 %v1610, 4294901760
        %1612 = vmatpush1.msra.mxu0 %v1611
        %1613 = vmatprep.subr.mxu0 0.0
        %v1614 = vand.u32 %v706, 4294901760
        %v1615 = vsub.f32 %v706, %v1614
        %v1616 = vand.u32 %v1615, 4294901760
        %1617 = vmatpush1.msra.mxu0 %v1616
        %1618 = vmatprep.subr.mxu0 0.0
        %v1619 = vand.u32 %v705, 4294901760
        %v1620 = vsub.f32 %v705, %v1619
        %v1621 = vand.u32 %v1620, 4294901760
        %1622 = vmatpush1.msra.mxu0 %v1621
        %1623 = vmatprep.subr.mxu0 0.0
        %v1624 = vand.u32 %v704, 4294901760
        %v1625 = vsub.f32 %v704, %v1624
        %v1626 = vand.u32 %v1625, 4294901760
        %1627 = vmatpush1.msra.mxu0 %v1626
        %1628 = vmatprep.subr.mxu0 0.0
        %v1629 = vand.u32 %v703, 4294901760
        %v1630 = vsub.f32 %v703, %v1629
        %v1631 = vand.u32 %v1630, 4294901760
        %1632 = vmatpush1.msra.mxu0 %v1631
        %1633 = vmatprep.subr.mxu0 0.0
        %v1634 = vand.u32 %v702, 4294901760
        %v1635 = vsub.f32 %v702, %v1634
        %v1636 = vand.u32 %v1635, 4294901760
        %1637 = vmatpush1.msra.mxu0 %v1636
        %1638 = vmatprep.subr.mxu0 0.0
        %v1639 = vand.u32 %v701, 4294901760
        %v1640 = vsub.f32 %v701, %v1639
        %v1641 = vand.u32 %v1640, 4294901760
        %1642 = vmatpush1.msra.mxu0 %v1641
        %1643 = vmatprep.subr.mxu0 0.0
        %v1644 = vand.u32 %v700, 4294901760
        %v1645 = vsub.f32 %v700, %v1644
        %v1646 = vand.u32 %v1645, 4294901760
        %1647 = vmatpush1.msra.mxu0 %v1646
        %1648 = vmatprep.subr.mxu0 0.0
        %v1649 = vand.u32 %v699, 4294901760
        %v1650 = vsub.f32 %v699, %v1649
        %v1651 = vand.u32 %v1650, 4294901760
        %1652 = vmatpush1.msra.mxu0 %v1651
        %1653 = vmatprep.subr.mxu0 0.0
        %v1654 = vand.u32 %v698, 4294901760
        %v1655 = vsub.f32 %v698, %v1654
        %v1656 = vand.u32 %v1655, 4294901760
        %1657 = vmatpush1.msra.mxu0 %v1656
        %1658 = vmatprep.subr.mxu0 0.0
        %v1659 = vand.u32 %v697, 4294901760
        %v1660 = vsub.f32 %v697, %v1659
        %v1661 = vand.u32 %v1660, 4294901760
        %1662 = vmatpush1.msra.mxu0 %v1661
        %1663 = vmatprep.subr.mxu0 0.0
        %v1664 = vand.u32 %v696, 4294901760
        %v1665 = vsub.f32 %v696, %v1664
        %v1666 = vand.u32 %v1665, 4294901760
        %1667 = vmatpush1.msra.mxu0 %v1666
        %1668 = vmatprep.subr.mxu0 0.0
        %v1669 = vand.u32 %v695, 4294901760
        %v1670 = vsub.f32 %v695, %v1669
        %v1671 = vand.u32 %v1670, 4294901760
        %1672 = vmatpush1.msra.mxu0 %v1671
        %1673 = vmatprep.subr.mxu0 0.0
        %v1674 = vand.u32 %v694, 4294901760
        %v1675 = vsub.f32 %v694, %v1674
        %v1676 = vand.u32 %v1675, 4294901760
        %1677 = vmatpush1.msra.mxu0 %v1676
        %1678 = vmatprep.subr.mxu0 0.0
        %v1679 = vand.u32 %v693, 4294901760
        %v1680 = vsub.f32 %v693, %v1679
        %v1681 = vand.u32 %v1680, 4294901760
        %1682 = vmatpush1.msra.mxu0 %v1681
        %1683 = vmatprep.subr.mxu0 0.0
        %v1684 = vand.u32 %v692, 4294901760
        %v1685 = vsub.f32 %v692, %v1684
        %v1686 = vand.u32 %v1685, 4294901760
        %1687 = vmatpush1.msra.mxu0 %v1686
        %1688 = vmatprep.subr.mxu0 0.0
        %1689 = vmatpush2.msra.mxu0 0.0
        %1690 = vmatprep.subr.mxu0 0.0
        %1691 = vmatpush2.msra.mxu0 0.0
        %1692 = vmatprep.subr.mxu0 0.0
        %1693 = vmatpush2.msra.mxu0 0.0
        %1694 = vmatprep.subr.mxu0 0.0
        %1695 = vmatpush2.msra.mxu0 0.0
        %1696 = vmatprep.subr.mxu0 0.0
        %1697 = vmatpush2.msra.mxu0 0.0
        %1698 = vmatprep.subr.mxu0 0.0
        %1699 = vmatpush2.msra.mxu0 0.0
        %1700 = vmatprep.subr.mxu0 0.0
        %1701 = vmatpush2.msra.mxu0 0.0
        %1702 = vmatprep.subr.mxu0 0.0
        %1703 = vmatpush2.msra.mxu0 0.0
        %1704 = vmatprep.subr.mxu0 0.0
        %1705 = vmatpush2.msra.mxu0 0.0
        %1706 = vmatprep.subr.mxu0 0.0
        %1707 = vmatpush2.msra.mxu0 0.0
        %1708 = vmatprep.subr.mxu0 0.0
        %1709 = vmatpush2.msra.mxu0 0.0
        %1710 = vmatprep.subr.mxu0 0.0
        %1711 = vmatpush2.msra.mxu0 0.0
        %1712 = vmatprep.subr.mxu0 0.0
        %1713 = vmatpush2.msra.mxu0 0.0
        %1714 = vmatprep.subr.mxu0 0.0
        %1715 = vmatpush2.msra.mxu0 0.0
        %1716 = vmatprep.subr.mxu0 0.0
        %1717 = vmatpush2.msra.mxu0 0.0
        %1718 = vmatprep.subr.mxu0 0.0
        %1719 = vmatpush2.msra.mxu0 0.0
        %1720 = vmatprep.mubr.f32.mxu0 0.0
        %v1721 = vand.u32 %v676, 4294901760
        %1722 = vmatmul.mubr.f32.gmra.mxu0 %v1721
        %v1723 = vpop.f32.mrf.mxu0
        %v1724 = vadd.f32 %v1485, %v1723
        %v1725 = vpop.f32.mrf.mxu0
        %1726 = vmatprep.mubr.f32.mxu0 0.0
        %v1727 = vand.u32 %v677, 4294901760
        %1728 = vmatmul.mubr.f32.gmra.mxu0 %v1727
        %v1729 = vpop.f32.mrf.mxu0
        %v1730 = vadd.f32 %v1493, %v1729
        %v1731 = vpop.f32.mrf.mxu0
        %1732 = vmatprep.mubr.f32.mxu0 0.0
        %v1733 = vand.u32 %v678, 4294901760
        %1734 = vmatmul.mubr.f32.gmra.mxu0 %v1733
        %v1735 = vpop.f32.mrf.mxu0
        %v1736 = vadd.f32 %v1501, %v1735
        %v1737 = vpop.f32.mrf.mxu0
        %1738 = vmatprep.mubr.f32.mxu0 0.0
        %v1739 = vand.u32 %v679, 4294901760
        %1740 = vmatmul.mubr.f32.gmra.mxu0 %v1739
        %v1741 = vpop.f32.mrf.mxu0
        %v1742 = vadd.f32 %v1509, %v1741
        %v1743 = vpop.f32.mrf.mxu0
        %1744 = vmatprep.mubr.f32.mxu0 0.0
        %v1745 = vand.u32 %v680, 4294901760
        %1746 = vmatmul.mubr.f32.gmra.mxu0 %v1745
        %v1747 = vpop.f32.mrf.mxu0
        %v1748 = vadd.f32 %v1517, %v1747
        %v1749 = vpop.f32.mrf.mxu0
        %1750 = vmatprep.mubr.f32.mxu0 0.0
        %v1751 = vand.u32 %v681, 4294901760
        %1752 = vmatmul.mubr.f32.gmra.mxu0 %v1751
        %v1753 = vpop.f32.mrf.mxu0
        %v1754 = vadd.f32 %v1525, %v1753
        %v1755 = vpop.f32.mrf.mxu0
        %1756 = vmatprep.mubr.f32.mxu0 0.0
        %v1757 = vand.u32 %v682, 4294901760
        %1758 = vmatmul.mubr.f32.gmra.mxu0 %v1757
        %v1759 = vpop.f32.mrf.mxu0
        %v1760 = vadd.f32 %v1533, %v1759
        %v1761 = vpop.f32.mrf.mxu0
        %1762 = vmatprep.mubr.f32.mxu0 0.0
        %v1763 = vand.u32 %v683, 4294901760
        %1764 = vmatmul.mubr.f32.gmra.mxu0 %v1763
        %v1765 = vpop.f32.mrf.mxu0
        %v1766 = vadd.f32 %v1541, %v1765
        %v1767 = vpop.f32.mrf.mxu0
        %1768 = vmatprep.mubr.f32.mxu0 0.0
        %v1769 = vand.u32 %v684, 4294901760
        %1770 = vmatmul.mubr.f32.gmra.mxu0 %v1769
        %v1771 = vpop.f32.mrf.mxu0
        %v1772 = vadd.f32 %v1549, %v1771
        %v1773 = vpop.f32.mrf.mxu0
        %1774 = vmatprep.mubr.f32.mxu0 0.0
        %v1775 = vand.u32 %v685, 4294901760
        %1776 = vmatmul.mubr.f32.gmra.mxu0 %v1775
        %v1777 = vpop.f32.mrf.mxu0
        %v1778 = vadd.f32 %v1557, %v1777
        %v1779 = vpop.f32.mrf.mxu0
        %1780 = vmatprep.mubr.f32.mxu0 0.0
        %v1781 = vand.u32 %v686, 4294901760
        %1782 = vmatmul.mubr.f32.gmra.mxu0 %v1781
        %v1783 = vpop.f32.mrf.mxu0
        %v1784 = vadd.f32 %v1565, %v1783
        %v1785 = vpop.f32.mrf.mxu0
        %1786 = vmatprep.mubr.f32.mxu0 0.0
        %v1787 = vand.u32 %v687, 4294901760
        %1788 = vmatmul.mubr.f32.gmra.mxu0 %v1787
        %v1789 = vpop.f32.mrf.mxu0
        %v1790 = vadd.f32 %v1573, %v1789
        %v1791 = vpop.f32.mrf.mxu0
        %1792 = vmatprep.mubr.f32.mxu0 0.0
        %v1793 = vand.u32 %v688, 4294901760
        %1794 = vmatmul.mubr.f32.gmra.mxu0 %v1793
        %v1795 = vpop.f32.mrf.mxu0
        %v1796 = vadd.f32 %v1581, %v1795
        %v1797 = vpop.f32.mrf.mxu0
        %1798 = vmatprep.mubr.f32.mxu0 0.0
        %v1799 = vand.u32 %v689, 4294901760
        %1800 = vmatmul.mubr.f32.gmra.mxu0 %v1799
        %v1801 = vpop.f32.mrf.mxu0
        %v1802 = vadd.f32 %v1589, %v1801
        %v1803 = vpop.f32.mrf.mxu0
        %1804 = vmatprep.mubr.f32.mxu0 0.0
        %v1805 = vand.u32 %v690, 4294901760
        %1806 = vmatmul.mubr.f32.gmra.mxu0 %v1805
        %v1807 = vpop.f32.mrf.mxu0
        %v1808 = vadd.f32 %v1597, %v1807
        %v1809 = vpop.f32.mrf.mxu0
        %1810 = vmatprep.mubr.f32.mxu0 0.0
        %v1811 = vand.u32 %v691, 4294901760
        %1812 = vmatmul.mubr.f32.gmra.mxu0 %v1811
        %v1813 = vpop.f32.mrf.mxu0
        %v1814 = vadd.f32 %v1605, %v1813
        %v1815 = vpop.f32.mrf.mxu0
        %1816 = vdwg.mxu0
        %1817 = vmatprep.subr.mxu0 0.0
        %v1818 = vand.u32 %v707, 4294901760
        %1819 = vmatpush1.msra.mxu0 %v1818
        %1820 = vmatprep.subr.mxu0 0.0
        %v1821 = vand.u32 %v706, 4294901760
        %1822 = vmatpush1.msra.mxu0 %v1821
        %1823 = vmatprep.subr.mxu0 0.0
        %v1824 = vand.u32 %v705, 4294901760
        %1825 = vmatpush1.msra.mxu0 %v1824
        %1826 = vmatprep.subr.mxu0 0.0
        %v1827 = vand.u32 %v704, 4294901760
        %1828 = vmatpush1.msra.mxu0 %v1827
        %1829 = vmatprep.subr.mxu0 0.0
        %v1830 = vand.u32 %v703, 4294901760
        %1831 = vmatpush1.msra.mxu0 %v1830
        %1832 = vmatprep.subr.mxu0 0.0
        %v1833 = vand.u32 %v702, 4294901760
        %1834 = vmatpush1.msra.mxu0 %v1833
        %1835 = vmatprep.subr.mxu0 0.0
        %v1836 = vand.u32 %v701, 4294901760
        %1837 = vmatpush1.msra.mxu0 %v1836
        %1838 = vmatprep.subr.mxu0 0.0
        %v1839 = vand.u32 %v700, 4294901760
        %1840 = vmatpush1.msra.mxu0 %v1839
        %1841 = vmatprep.subr.mxu0 0.0
        %v1842 = vand.u32 %v699, 4294901760
        %1843 = vmatpush1.msra.mxu0 %v1842
        %1844 = vmatprep.subr.mxu0 0.0
        %v1845 = vand.u32 %v698, 4294901760
        %1846 = vmatpush1.msra.mxu0 %v1845
        %1847 = vmatprep.subr.mxu0 0.0
        %v1848 = vand.u32 %v697, 4294901760
        %1849 = vmatpush1.msra.mxu0 %v1848
        %1850 = vmatprep.subr.mxu0 0.0
        %v1851 = vand.u32 %v696, 4294901760
        %1852 = vmatpush1.msra.mxu0 %v1851
        %1853 = vmatprep.subr.mxu0 0.0
        %v1854 = vand.u32 %v695, 4294901760
        %1855 = vmatpush1.msra.mxu0 %v1854
        %1856 = vmatprep.subr.mxu0 0.0
        %v1857 = vand.u32 %v694, 4294901760
        %1858 = vmatpush1.msra.mxu0 %v1857
        %1859 = vmatprep.subr.mxu0 0.0
        %v1860 = vand.u32 %v693, 4294901760
        %1861 = vmatpush1.msra.mxu0 %v1860
        %1862 = vmatprep.subr.mxu0 0.0
        %v1863 = vand.u32 %v692, 4294901760
        %1864 = vmatpush1.msra.mxu0 %v1863
        %1865 = vmatprep.subr.mxu0 0.0
        %1866 = vmatpush2.msra.mxu0 0.0
        %1867 = vmatprep.subr.mxu0 0.0
        %1868 = vmatpush2.msra.mxu0 0.0
        %1869 = vmatprep.subr.mxu0 0.0
        %1870 = vmatpush2.msra.mxu0 0.0
        %1871 = vmatprep.subr.mxu0 0.0
        %1872 = vmatpush2.msra.mxu0 0.0
        %1873 = vmatprep.subr.mxu0 0.0
        %1874 = vmatpush2.msra.mxu0 0.0
        %1875 = vmatprep.subr.mxu0 0.0
        %1876 = vmatpush2.msra.mxu0 0.0
        %1877 = vmatprep.subr.mxu0 0.0
        %1878 = vmatpush2.msra.mxu0 0.0
        %1879 = vmatprep.subr.mxu0 0.0
        %1880 = vmatpush2.msra.mxu0 0.0
        %1881 = vmatprep.subr.mxu0 0.0
        %1882 = vmatpush2.msra.mxu0 0.0
        %1883 = vmatprep.subr.mxu0 0.0
        %1884 = vmatpush2.msra.mxu0 0.0
        %1885 = vmatprep.subr.mxu0 0.0
        %1886 = vmatpush2.msra.mxu0 0.0
        %1887 = vmatprep.subr.mxu0 0.0
        %1888 = vmatpush2.msra.mxu0 0.0
        %1889 = vmatprep.subr.mxu0 0.0
        %1890 = vmatpush2.msra.mxu0 0.0
        %1891 = vmatprep.subr.mxu0 0.0
        %1892 = vmatpush2.msra.mxu0 0.0
        %1893 = vmatprep.subr.mxu0 0.0
        %1894 = vmatpush2.msra.mxu0 0.0
        %1895 = vmatprep.subr.mxu0 0.0
        %1896 = vmatpush2.msra.mxu0 0.0
        %1897 = vmatprep.mubr.f32.mxu0 0.0
        %v1898 = vand.u32 %v676, 4294901760
        %1899 = vmatmul.mubr.f32.gmra.mxu0 %v1898
        %v1900 = vpop.f32.mrf.mxu0
        %v1901 = vadd.f32 %v1724, %v1900
        %v1902 = vpop.f32.mrf.mxu0
        %1903 = vmatprep.mubr.f32.mxu0 0.0
        %v1904 = vand.u32 %v677, 4294901760
        %1905 = vmatmul.mubr.f32.gmra.mxu0 %v1904
        %v1906 = vpop.f32.mrf.mxu0
        %v1907 = vadd.f32 %v1730, %v1906
        %v1908 = vpop.f32.mrf.mxu0
        %1909 = vmatprep.mubr.f32.mxu0 0.0
        %v1910 = vand.u32 %v678, 4294901760
        %1911 = vmatmul.mubr.f32.gmra.mxu0 %v1910
        %v1912 = vpop.f32.mrf.mxu0
        %v1913 = vadd.f32 %v1736, %v1912
        %v1914 = vpop.f32.mrf.mxu0
        %1915 = vmatprep.mubr.f32.mxu0 0.0
        %v1916 = vand.u32 %v679, 4294901760
        %1917 = vmatmul.mubr.f32.gmra.mxu0 %v1916
        %v1918 = vpop.f32.mrf.mxu0
        %v1919 = vadd.f32 %v1742, %v1918
        %v1920 = vpop.f32.mrf.mxu0
        %1921 = vmatprep.mubr.f32.mxu0 0.0
        %v1922 = vand.u32 %v680, 4294901760
        %1923 = vmatmul.mubr.f32.gmra.mxu0 %v1922
        %v1924 = vpop.f32.mrf.mxu0
        %v1925 = vadd.f32 %v1748, %v1924
        %v1926 = vpop.f32.mrf.mxu0
        %1927 = vmatprep.mubr.f32.mxu0 0.0
        %v1928 = vand.u32 %v681, 4294901760
        %1929 = vmatmul.mubr.f32.gmra.mxu0 %v1928
        %v1930 = vpop.f32.mrf.mxu0
        %v1931 = vadd.f32 %v1754, %v1930
        %v1932 = vpop.f32.mrf.mxu0
        %1933 = vmatprep.mubr.f32.mxu0 0.0
        %v1934 = vand.u32 %v682, 4294901760
        %1935 = vmatmul.mubr.f32.gmra.mxu0 %v1934
        %v1936 = vpop.f32.mrf.mxu0
        %v1937 = vadd.f32 %v1760, %v1936
        %v1938 = vpop.f32.mrf.mxu0
        %1939 = vmatprep.mubr.f32.mxu0 0.0
        %v1940 = vand.u32 %v683, 4294901760
        %1941 = vmatmul.mubr.f32.gmra.mxu0 %v1940
        %v1942 = vpop.f32.mrf.mxu0
        %v1943 = vadd.f32 %v1766, %v1942
        %v1944 = vpop.f32.mrf.mxu0
        %1945 = vmatprep.mubr.f32.mxu0 0.0
        %v1946 = vand.u32 %v684, 4294901760
        %1947 = vmatmul.mubr.f32.gmra.mxu0 %v1946
        %v1948 = vpop.f32.mrf.mxu0
        %v1949 = vadd.f32 %v1772, %v1948
        %v1950 = vpop.f32.mrf.mxu0
        %1951 = vmatprep.mubr.f32.mxu0 0.0
        %v1952 = vand.u32 %v685, 4294901760
        %1953 = vmatmul.mubr.f32.gmra.mxu0 %v1952
        %v1954 = vpop.f32.mrf.mxu0
        %v1955 = vadd.f32 %v1778, %v1954
        %v1956 = vpop.f32.mrf.mxu0
        %1957 = vmatprep.mubr.f32.mxu0 0.0
        %v1958 = vand.u32 %v686, 4294901760
        %1959 = vmatmul.mubr.f32.gmra.mxu0 %v1958
        %v1960 = vpop.f32.mrf.mxu0
        %v1961 = vadd.f32 %v1784, %v1960
        %v1962 = vpop.f32.mrf.mxu0
        %1963 = vmatprep.mubr.f32.mxu0 0.0
        %v1964 = vand.u32 %v687, 4294901760
        %1965 = vmatmul.mubr.f32.gmra.mxu0 %v1964
        %v1966 = vpop.f32.mrf.mxu0
        %v1967 = vadd.f32 %v1790, %v1966
        %v1968 = vpop.f32.mrf.mxu0
        %1969 = vmatprep.mubr.f32.mxu0 0.0
        %v1970 = vand.u32 %v688, 4294901760
        %1971 = vmatmul.mubr.f32.gmra.mxu0 %v1970
        %v1972 = vpop.f32.mrf.mxu0
        %v1973 = vadd.f32 %v1796, %v1972
        %v1974 = vpop.f32.mrf.mxu0
        %1975 = vmatprep.mubr.f32.mxu0 0.0
        %v1976 = vand.u32 %v689, 4294901760
        %1977 = vmatmul.mubr.f32.gmra.mxu0 %v1976
        %v1978 = vpop.f32.mrf.mxu0
        %v1979 = vadd.f32 %v1802, %v1978
        %v1980 = vpop.f32.mrf.mxu0
        %1981 = vmatprep.mubr.f32.mxu0 0.0
        %v1982 = vand.u32 %v690, 4294901760
        %1983 = vmatmul.mubr.f32.gmra.mxu0 %v1982
        %v1984 = vpop.f32.mrf.mxu0
        %v1985 = vadd.f32 %v1808, %v1984
        %v1986 = vpop.f32.mrf.mxu0
        %1987 = vmatprep.mubr.f32.mxu0 0.0
        %v1988 = vand.u32 %v691, 4294901760
        %1989 = vmatmul.mubr.f32.gmra.mxu0 %v1988
        %v1990 = vpop.f32.mrf.mxu0
        %v1991 = vadd.f32 %v1814, %v1990
        %v1992 = vpop.f32.mrf.mxu0
        %1993 = vdwg.mxu0
        %v1995 = vlaneseq
        %v1996 = vshrl.u32 %v1995, 7
        %v1997 = vsub.s32 0, %v1996
        %v1998 = vrot.slane %v278, %v1997
        %v2000 = vadd.f32 %v260, %v1998
        %v2001 = vadd.f32 %v261, %v1998
        %v2002 = vadd.f32 %v262, %v1998
        %v2003 = vadd.f32 %v263, %v1998
        %v2004 = vadd.f32 %v264, %v1998
        %v2005 = vadd.f32 %v265, %v1998
        %v2006 = vadd.f32 %v266, %v1998
        %v2007 = vadd.f32 %v267, %v1998
        %v2008 = vadd.f32 %v268, %v1998
        %v2009 = vadd.f32 %v269, %v1998
        %v2010 = vadd.f32 %v270, %v1998
        %v2011 = vadd.f32 %v271, %v1998
        %v2012 = vadd.f32 %v272, %v1998
        %v2013 = vadd.f32 %v273, %v1998
        %v2014 = vadd.f32 %v274, %v1998
        %v2015 = vadd.f32 %v275, %v1998
        %v2016 = vadd.f32 %v2000, %v1901
        %v2017 = vadd.f32 %v2001, %v1907
        %v2018 = vadd.f32 %v2002, %v1913
        %v2019 = vadd.f32 %v2003, %v1919
        %v2020 = vadd.f32 %v2004, %v1925
        %v2021 = vadd.f32 %v2005, %v1931
        %v2022 = vadd.f32 %v2006, %v1937
        %v2023 = vadd.f32 %v2007, %v1943
        %v2024 = vadd.f32 %v2008, %v1949
        %v2025 = vadd.f32 %v2009, %v1955
        %v2026 = vadd.f32 %v2010, %v1961
        %v2027 = vadd.f32 %v2011, %v1967
        %v2028 = vadd.f32 %v2012, %v1973
        %v2029 = vadd.f32 %v2013, %v1979
        %v2030 = vadd.f32 %v2014, %v1985
        %v2031 = vadd.f32 %v2015, %v1991
        %2032 = vst [vmem:[%s257] sm:$0xff] %v2016
        %2033 = vst [vmem:[%s257 + $0x8] sm:$0xff] %v2017
        %2034 = vst [vmem:[%s257 + $0x10] sm:$0xff] %v2018
        %2035 = vst [vmem:[%s257 + $0x18] sm:$0xff] %v2019
        %2036 = vst [vmem:[%s257 + $0x20] sm:$0xff] %v2020
        %2037 = vst [vmem:[%s257 + $0x28] sm:$0xff] %v2021
        %2038 = vst [vmem:[%s257 + $0x30] sm:$0xff] %v2022
        %2039 = vst [vmem:[%s257 + $0x38] sm:$0xff] %v2023
        %2040 = vst [vmem:[%s257 + $0x40] sm:$0xff] %v2024
        %2041 = vst [vmem:[%s257 + $0x48] sm:$0xff] %v2025
        %2042 = vst [vmem:[%s257 + $0x50] sm:$0xff] %v2026
        %2043 = vst [vmem:[%s257 + $0x58] sm:$0xff] %v2027
        %2044 = vst [vmem:[%s257 + $0x60] sm:$0xff] %v2028
        %2045 = vst [vmem:[%s257 + $0x68] sm:$0xff] %v2029
        %2046 = vst [vmem:[%s257 + $0x70] sm:$0xff] %v2030
        %2047 = vst [vmem:[%s257 + $0x78] sm:$0xff] %v2031
        %s2048 = sand.u32 %s141, 1
        %s2049 = scalar_lea.sflag [#allocation4], %s2048
        %s2050 = sand.u32 %s141, 1
        %s2051 = smul.addr %s2050, 128
        %s2052 = scalar_lea.vmem [#allocation7], %s2051
        // Predicated region
        $region49: #{sublayer_forward.1} parent=39 // pred_check
          %p2053 = pneg %p151
        $region50: #{sublayer_forward.1} parent=39 // pred_check_branch
          %2055 = sbr.rel (%p2053) target = $region52
        $region51: #{sublayer_forward.1} parent=39 // pred_region
          %s2056 = smul.u32 16, %s23
          %s2058 = ssub.s32 2048, 2048
          %2059 = vsyncadd %s2049, %s2058
          %s2060 = smul.addr %s2056, 128
          %s2061 = scalar_lea.hbm %s5, %s2060
          %s2062 = sshll.u32 %s2052, 4
          %s2063 = int_to_ptr.vmem [resolvable:$true] %s2062
          %2068 = dma.vmem_to_hbm [thread:$0]  %s2063, 2048, %s2061, %s2049, 128, 128, 8
        $region52: #{sublayer_forward.1} parent=39 // pred_fallthru
          _
      $region40: #{sublayer_forward.1} parent=5 // pred_fallthru
        _
      %p2069 = scmp.le.s32.totalorder 2, %s18
      // Predicated region
      $region53: #{sublayer_forward.1} parent=5 // pred_check
        %p2070 = pneg %p2069
      $region54: #{sublayer_forward.1} parent=5 // pred_check_branch
        %2072 = sbr.rel (%p2070) target = $region56
      $region55: #{sublayer_forward.1} parent=5 // pred_region
        %s2073 = ssub.s32 %s18, 2
        // Predicated region
        $region57: #{sublayer_forward.1} parent=55 // pred_check
          %p2074 = pneg %p157
        $region58: #{sublayer_forward.1} parent=55 // pred_check_branch
          %2076 = sbr.rel (%p2074) target = $region60
        $region59: #{sublayer_forward.1} parent=55 // pred_region
          %s2077 = sand.u32 %s142, 1
          %s2078 = scalar_lea.sflag [#allocation4], %s2077
          %s2079 = sand.u32 %s142, 1
          %s2080 = smul.addr %s2079, 128
          %s2081 = scalar_lea.vmem [#allocation7], %s2080
          %2082 = dma.done %s2078, 2048
        $region60: #{sublayer_forward.1} parent=55 // pred_fallthru
          _
      $region56: #{sublayer_forward.1} parent=5 // pred_fallthru
        _
    $region6: #{sublayer_forward.1} parent=1 // loop_footer
      %s22 = sadd.s32 1, %s18
    $region7: #{sublayer_forward.1} parent=1 // loop_footer_branch
      %17 = sbr.rel target = $region3
    $region8: #{sublayer_forward.1} parent=1 // loop_exit
      _
    %2083 = vsyncpa [#allocation3], 1
    %s2084 = scalar_lea.sflag [#allocation3], 1
    %2085 = vsyncpa %s2084, 1
    %2086 = vsyncpa [#allocation6], 1
    %2087 = vsyncpa [#allocation4], 1
    %s2088 = scalar_lea.sflag [#allocation4], 1
    %2089 = vsyncpa %s2088, 1

</llo_original>
